<compile_context>
chip_gen: v5e
topology: v5e:2x2
jax: 0.10.0
libtpu: 0.0.40
codegen_flags: <defaults>
</compile_context>

<pallas_src>
import functools

import jax
import jax.numpy as jnp
from jax import lax
from jax.experimental import pallas as pl
from jax.experimental.pallas import tpu as pltpu


def _round_up(v, m):
    return (v + m - 1) // m * m


def minimal_gru_kernel(x_ref, w_ref, b_ref, uh_ref, uz_ref, out_ref,
                       *, T, Bp, Hp, keep_prob):
    """Whole-sequence minimal-GRU forward (padded, lane-dense layout).

    x_ref   : (T*Bp, Dp)  bf16  flattened, padded input sequence
    w_ref   : (Dp, 2*Hp)  bf16  fused [Wh | Wz] feed-forward weights (pre-transposed)
    b_ref   : (1, 2*Hp)   f32   fused [bh | bz] biases
    uh_ref  : (Hp, Hp)    bf16  recurrent candidate weights
    uz_ref  : (Hp, Hp)    bf16  recurrent gate weights
    out_ref : (T*Bp, Hp)  f32   stacked hidden states
    """
    f32 = jnp.float32
    bf16 = jnp.bfloat16

    # Hot path 1: one fused, lane-dense MXU matmul for both input projections,
    # kept in registers (T*Bp x 2Hp f32 fits in vregs at these sizes).
    proj = (jnp.dot(x_ref[...], w_ref[...], preferred_element_type=f32)
            + b_ref[...])

    # Hot path 2: serial recurrence; h carried in registers; loop unrolled at
    # trace time so all slices below are compile-time constants.
    ht = jnp.zeros((Bp, Hp), f32)
    for k in range(T):
        whx = proj[k * Bp:(k + 1) * Bp, 0:Hp]
        wzx = proj[k * Bp:(k + 1) * Bp, Hp:2 * Hp]
        # sigmoid(x) == 0.5*(tanh(0.5*x)+1): single EUP op on the serial path.
        zt = 0.5 * (jnp.tanh(0.5 * (
            wzx + jnp.dot(ht.astype(bf16), uz_ref[...],
                          preferred_element_type=f32))) + 1.0)
        at = whx + jnp.dot((zt * ht).astype(bf16), uh_ref[...],
                           preferred_element_type=f32)
        hcand = jnp.tanh(at)
        if keep_prob != 1.0:                 # test-mode dropout scaling (1 - drop)
            hcand = hcand * keep_prob
        ht = hcand + zt * (ht - hcand)       # == zt*ht + (1-zt)*hcand
        out_ref[k * Bp:(k + 1) * Bp, :] = ht # full (Bp, Hp) aligned store


def minimal_gru(x, wh, wz, uh, uz, bh, bz, drop=0.0):
    """x: (T, B, D); weights pre-transposed to (in, out). Returns (T, B, H)."""
    T, B, D = x.shape
    H = wh.shape[1]
    Bp = _round_up(B, 16)       # bf16 vregs pack 16 sublanes
    Dp = _round_up(D, 128)      # lane-dense contraction dim
    Hp = _round_up(H, 128)      # lane-dense hidden dim

    f32, bf16 = jnp.float32, jnp.bfloat16
    # Zero-padding keeps the math exact: padded rows/cols contribute nothing and
    # padded hidden lanes remain 0 for the whole recurrence; padded batch rows are
    # sliced off at the end.
    # TODO(synk): for long T, avoid this extra padded HBM copy (pad via BlockSpec).
    xp = jnp.zeros((T, Bp, Dp), bf16).at[:, :B, :D].set(x.astype(bf16))
    x2d = xp.reshape(T * Bp, Dp)

    w = jnp.zeros((Dp, 2 * Hp), bf16)
    w = w.at[:D, :H].set(wh.astype(bf16)).at[:D, Hp:Hp + H].set(wz.astype(bf16))
    b = jnp.zeros((1, 2 * Hp), f32)
    b = b.at[:, :H].set(bh.astype(f32)).at[:, Hp:Hp + H].set(bz.astype(f32))
    uhp = jnp.zeros((Hp, Hp), bf16).at[:H, :H].set(uh.astype(bf16))
    uzp = jnp.zeros((Hp, Hp), bf16).at[:H, :H].set(uz.astype(bf16))

    kernel = functools.partial(minimal_gru_kernel, T=T, Bp=Bp, Hp=Hp,
                               keep_prob=float(1.0 - drop))
    out = pl.pallas_call(
        kernel,
        out_shape=jax.ShapeDtypeStruct((T * Bp, Hp), f32),
        in_specs=[pl.BlockSpec(memory_space=pltpu.MemorySpace.VMEM)] * 5,
        out_specs=pl.BlockSpec(memory_space=pltpu.MemorySpace.VMEM),
    )(x2d, w, b, uhp, uzp)

    return out.reshape(T, Bp, Hp)[:, :B, :H]


def minimal_gru_ref(x, wh, wz, uh, uz, bh, bz, drop=0.0):
    """Pure-JAX f32 reference mirroring the PyTorch forward (test mode)."""
    T, B, _ = x.shape
    H = wh.shape[1]
    hp = lax.Precision.HIGHEST
    whx = jnp.einsum('tbd,dh->tbh', x, wh, precision=hp) + bh
    wzx = jnp.einsum('tbd,dh->tbh', x, wz, precision=hp) + bz
    ht = jnp.zeros((B, H), jnp.float32)
    outs = []
    for k in range(T):
        zt = jax.nn.sigmoid(wzx[k] + jnp.dot(ht, uz, precision=hp))
        at = whx[k] + jnp.dot(zt * ht, uh, precision=hp)
        hcand = jnp.tanh(at) * (1.0 - drop)
        ht = zt * ht + (1.0 - zt) * hcand
        outs.append(ht)
    return jnp.stack(outs)


if __name__ == "__main__":
    # Small shapes consistent with the module: seq T=8, batch B=4, inp_dim D=16, hidden H=32.
    T, B, D, H = 8, 4, 16, 32
    key = jax.random.PRNGKey(0)
    kx, kwh, kwz, kuh, kuz, kbh, kbz = jax.random.split(key, 7)

    x = jax.random.normal(kx, (T, B, D), dtype=jnp.float32)

    # nn.Linear-style deterministic init: U(-1/sqrt(fan_in), 1/sqrt(fan_in)).
    lim_in = 1.0 / jnp.sqrt(jnp.float32(D))
    wh = jax.random.uniform(kwh, (D, H), jnp.float32, -lim_in, lim_in)
    wz = jax.random.uniform(kwz, (D, H), jnp.float32, -lim_in, lim_in)
    bh = jax.random.uniform(kbh, (1, H), jnp.float32, -lim_in, lim_in)
    bz = jax.random.uniform(kbz, (1, H), jnp.float32, -lim_in, lim_in)

    # Recurrent weights: orthogonal init (minimalgru_orthinit=True), deterministic.
    uh = jnp.linalg.qr(jax.random.normal(kuh, (H, H), jnp.float32))[0]
    uz = jnp.linalg.qr(jax.random.normal(kuz, (H, H), jnp.float32))[0]

    out = minimal_gru(x, wh, wz, uh, uz, bh, bz)
    out = jax.block_until_ready(out)

    ref = minimal_gru_ref(x, wh, wz, uh, uz, bh, bz)
    assert out.shape == (T, B, H)
    # bf16 MXU operands (per perf review) -> compare against the f32 reference
    # with a correspondingly relaxed tolerance.
    assert jnp.allclose(out, ref, atol=5e-2, rtol=5e-2), float(
        jnp.max(jnp.abs(out - ref)))

    print("KERNEL_OK")
</pallas_src>

<mosaic_0001>
module attributes {stable_mosaic.version = 11 : i64} {
  func.func @minimal_gru_kernel(%arg0: memref<128x128xbf16, #tpu.memory_space<vmem>>, %arg1: memref<128x256xbf16, #tpu.memory_space<vmem>>, %arg2: memref<1x256xf32, #tpu.memory_space<vmem>>, %arg3: memref<128x128xbf16, #tpu.memory_space<vmem>>, %arg4: memref<128x128xbf16, #tpu.memory_space<vmem>>, %arg5: memref<128x128xf32, #tpu.memory_space<vmem>>) attributes {dimension_semantics = [], scalar_prefetch = 0 : i64, scratch_operands = 0 : i64, tpu.core_type = #tpu.core_type<tc>} {
    %c0 = arith.constant 0 : index
    %c0_0 = arith.constant 0 : index
    %0 = vector.load %arg0[%c0, %c0_0] : memref<128x128xbf16, #tpu.memory_space<vmem>>, vector<128x128xbf16>
    %c0_1 = arith.constant 0 : index
    %c0_2 = arith.constant 0 : index
    %1 = vector.load %arg1[%c0_1, %c0_2] : memref<128x256xbf16, #tpu.memory_space<vmem>>, vector<128x256xbf16>
    %cst = arith.constant dense<0.000000e+00> : vector<128x256xf32>
    %2 = tpu.matmul %0, %1, %cst {dimension_numbers = #tpu.dot_dimension_numbers<[1], [0], [0], [1], [0, 0, 1, 1], [], []>} : vector<128x128xbf16>, vector<128x256xbf16>, vector<128x256xf32> -> vector<128x256xf32>
    %c0_3 = arith.constant 0 : index
    %c0_4 = arith.constant 0 : index
    %3 = vector.load %arg2[%c0_3, %c0_4] : memref<1x256xf32, #tpu.memory_space<vmem>>, vector<1x256xf32>
    %4 = vector.broadcast %3 : vector<1x256xf32> to vector<128x256xf32>
    %5 = arith.addf %2, %4 : vector<128x256xf32>
    %cst_5 = arith.constant 0.000000e+00 : f32
    %6 = vector.broadcast %cst_5 : f32 to vector<16x128xf32>
    %7 = vector.extract_strided_slice %5 {offsets = [0, 0], sizes = [16, 128], strides = [1, 1]} : vector<128x256xf32> to vector<16x128xf32>
    %8 = vector.extract_strided_slice %5 {offsets = [0, 128], sizes = [16, 128], strides = [1, 1]} : vector<128x256xf32> to vector<16x128xf32>
    %9 = arith.truncf %6 : vector<16x128xf32> to vector<16x128xbf16>
    %c0_6 = arith.constant 0 : index
    %c0_7 = arith.constant 0 : index
    %10 = vector.load %arg4[%c0_6, %c0_7] : memref<128x128xbf16, #tpu.memory_space<vmem>>, vector<128x128xbf16>
    %cst_8 = arith.constant dense<0.000000e+00> : vector<16x128xf32>
    %11 = tpu.matmul %9, %10, %cst_8 {dimension_numbers = #tpu.dot_dimension_numbers<[1], [0], [0], [1], [0, 0, 1, 1], [], []>} : vector<16x128xbf16>, vector<128x128xbf16>, vector<16x128xf32> -> vector<16x128xf32>
    %12 = arith.addf %8, %11 : vector<16x128xf32>
    %cst_9 = arith.constant 5.000000e-01 : f32
    %13 = vector.broadcast %cst_9 : f32 to vector<16x128xf32>
    %14 = arith.mulf %13, %12 : vector<16x128xf32>
    %15 = math.tanh %14 : vector<16x128xf32>
    %cst_10 = arith.constant 1.000000e+00 : f32
    %16 = vector.broadcast %cst_10 : f32 to vector<16x128xf32>
    %17 = arith.addf %15, %16 : vector<16x128xf32>
    %cst_11 = arith.constant 5.000000e-01 : f32
    %18 = vector.broadcast %cst_11 : f32 to vector<16x128xf32>
    %19 = arith.mulf %18, %17 : vector<16x128xf32>
    %20 = arith.mulf %19, %6 : vector<16x128xf32>
    %21 = arith.truncf %20 : vector<16x128xf32> to vector<16x128xbf16>
    %c0_12 = arith.constant 0 : index
    %c0_13 = arith.constant 0 : index
    %22 = vector.load %arg3[%c0_12, %c0_13] : memref<128x128xbf16, #tpu.memory_space<vmem>>, vector<128x128xbf16>
    %cst_14 = arith.constant dense<0.000000e+00> : vector<16x128xf32>
    %23 = tpu.matmul %21, %22, %cst_14 {dimension_numbers = #tpu.dot_dimension_numbers<[1], [0], [0], [1], [0, 0, 1, 1], [], []>} : vector<16x128xbf16>, vector<128x128xbf16>, vector<16x128xf32> -> vector<16x128xf32>
    %24 = arith.addf %7, %23 : vector<16x128xf32>
    %25 = math.tanh %24 : vector<16x128xf32>
    %26 = arith.subf %6, %25 : vector<16x128xf32>
    %27 = arith.mulf %19, %26 : vector<16x128xf32>
    %28 = arith.addf %25, %27 : vector<16x128xf32>
    %c0_15 = arith.constant 0 : index
    %c0_16 = arith.constant 0 : index
    %29 = vector.load %arg5[%c0_15, %c0_16] : memref<128x128xf32, #tpu.memory_space<vmem>>, vector<16x128xf32>
    tpu.vector_store %arg5[%c0_15, %c0_16], %28 {strides = array<i32>} : memref<128x128xf32, #tpu.memory_space<vmem>>, vector<16x128xf32>,
    %30 = vector.extract_strided_slice %5 {offsets = [16, 0], sizes = [16, 128], strides = [1, 1]} : vector<128x256xf32> to vector<16x128xf32>
    %31 = vector.extract_strided_slice %5 {offsets = [16, 128], sizes = [16, 128], strides = [1, 1]} : vector<128x256xf32> to vector<16x128xf32>
    %32 = arith.truncf %28 : vector<16x128xf32> to vector<16x128xbf16>
    %c0_17 = arith.constant 0 : index
    %c0_18 = arith.constant 0 : index
    %33 = vector.load %arg4[%c0_17, %c0_18] : memref<128x128xbf16, #tpu.memory_space<vmem>>, vector<128x128xbf16>
    %cst_19 = arith.constant dense<0.000000e+00> : vector<16x128xf32>
    %34 = tpu.matmul %32, %33, %cst_19 {dimension_numbers = #tpu.dot_dimension_numbers<[1], [0], [0], [1], [0, 0, 1, 1], [], []>} : vector<16x128xbf16>, vector<128x128xbf16>, vector<16x128xf32> -> vector<16x128xf32>
    %35 = arith.addf %31, %34 : vector<16x128xf32>
    %cst_20 = arith.constant 5.000000e-01 : f32
    %36 = vector.broadcast %cst_20 : f32 to vector<16x128xf32>
    %37 = arith.mulf %36, %35 : vector<16x128xf32>
    %38 = math.tanh %37 : vector<16x128xf32>
    %cst_21 = arith.constant 1.000000e+00 : f32
    %39 = vector.broadcast %cst_21 : f32 to vector<16x128xf32>
    %40 = arith.addf %38, %39 : vector<16x128xf32>
    %cst_22 = arith.constant 5.000000e-01 : f32
    %41 = vector.broadcast %cst_22 : f32 to vector<16x128xf32>
    %42 = arith.mulf %41, %40 : vector<16x128xf32>
    %43 = arith.mulf %42, %28 : vector<16x128xf32>
    %44 = arith.truncf %43 : vector<16x128xf32> to vector<16x128xbf16>
    %c0_23 = arith.constant 0 : index
    %c0_24 = arith.constant 0 : index
    %45 = vector.load %arg3[%c0_23, %c0_24] : memref<128x128xbf16, #tpu.memory_space<vmem>>, vector<128x128xbf16>
    %cst_25 = arith.constant dense<0.000000e+00> : vector<16x128xf32>
    %46 = tpu.matmul %44, %45, %cst_25 {dimension_numbers = #tpu.dot_dimension_numbers<[1], [0], [0], [1], [0, 0, 1, 1], [], []>} : vector<16x128xbf16>, vector<128x128xbf16>, vector<16x128xf32> -> vector<16x128xf32>
    %47 = arith.addf %30, %46 : vector<16x128xf32>
    %48 = math.tanh %47 : vector<16x128xf32>
    %49 = arith.subf %28, %48 : vector<16x128xf32>
    %50 = arith.mulf %42, %49 : vector<16x128xf32>
    %51 = arith.addf %48, %50 : vector<16x128xf32>
    %c16 = arith.constant 16 : index
    %c0_26 = arith.constant 0 : index
    %52 = vector.load %arg5[%c16, %c0_26] : memref<128x128xf32, #tpu.memory_space<vmem>>, vector<16x128xf32>
    tpu.vector_store %arg5[%c16, %c0_26], %51 {strides = array<i32>} : memref<128x128xf32, #tpu.memory_space<vmem>>, vector<16x128xf32>,
    %53 = vector.extract_strided_slice %5 {offsets = [32, 0], sizes = [16, 128], strides = [1, 1]} : vector<128x256xf32> to vector<16x128xf32>
    %54 = vector.extract_strided_slice %5 {offsets = [32, 128], sizes = [16, 128], strides = [1, 1]} : vector<128x256xf32> to vector<16x128xf32>
    %55 = arith.truncf %51 : vector<16x128xf32> to vector<16x128xbf16>
    %c0_27 = arith.constant 0 : index
    %c0_28 = arith.constant 0 : index
    %56 = vector.load %arg4[%c0_27, %c0_28] : memref<128x128xbf16, #tpu.memory_space<vmem>>, vector<128x128xbf16>
    %cst_29 = arith.constant dense<0.000000e+00> : vector<16x128xf32>
    %57 = tpu.matmul %55, %56, %cst_29 {dimension_numbers = #tpu.dot_dimension_numbers<[1], [0], [0], [1], [0, 0, 1, 1], [], []>} : vector<16x128xbf16>, vector<128x128xbf16>, vector<16x128xf32> -> vector<16x128xf32>
    %58 = arith.addf %54, %57 : vector<16x128xf32>
    %cst_30 = arith.constant 5.000000e-01 : f32
    %59 = vector.broadcast %cst_30 : f32 to vector<16x128xf32>
    %60 = arith.mulf %59, %58 : vector<16x128xf32>
    %61 = math.tanh %60 : vector<16x128xf32>
    %cst_31 = arith.constant 1.000000e+00 : f32
    %62 = vector.broadcast %cst_31 : f32 to vector<16x128xf32>
    %63 = arith.addf %61, %62 : vector<16x128xf32>
    %cst_32 = arith.constant 5.000000e-01 : f32
    %64 = vector.broadcast %cst_32 : f32 to vector<16x128xf32>
    %65 = arith.mulf %64, %63 : vector<16x128xf32>
    %66 = arith.mulf %65, %51 : vector<16x128xf32>
    %67 = arith.truncf %66 : vector<16x128xf32> to vector<16x128xbf16>
    %c0_33 = arith.constant 0 : index
    %c0_34 = arith.constant 0 : index
    %68 = vector.load %arg3[%c0_33, %c0_34] : memref<128x128xbf16, #tpu.memory_space<vmem>>, vector<128x128xbf16>
    %cst_35 = arith.constant dense<0.000000e+00> : vector<16x128xf32>
    %69 = tpu.matmul %67, %68, %cst_35 {dimension_numbers = #tpu.dot_dimension_numbers<[1], [0], [0], [1], [0, 0, 1, 1], [], []>} : vector<16x128xbf16>, vector<128x128xbf16>, vector<16x128xf32> -> vector<16x128xf32>
    %70 = arith.addf %53, %69 : vector<16x128xf32>
    %71 = math.tanh %70 : vector<16x128xf32>
    %72 = arith.subf %51, %71 : vector<16x128xf32>
    %73 = arith.mulf %65, %72 : vector<16x128xf32>
    %74 = arith.addf %71, %73 : vector<16x128xf32>
    %c32 = arith.constant 32 : index
    %c0_36 = arith.constant 0 : index
    %75 = vector.load %arg5[%c32, %c0_36] : memref<128x128xf32, #tpu.memory_space<vmem>>, vector<16x128xf32>
    tpu.vector_store %arg5[%c32, %c0_36], %74 {strides = array<i32>} : memref<128x128xf32, #tpu.memory_space<vmem>>, vector<16x128xf32>,
    %76 = vector.extract_strided_slice %5 {offsets = [48, 0], sizes = [16, 128], strides = [1, 1]} : vector<128x256xf32> to vector<16x128xf32>
    %77 = vector.extract_strided_slice %5 {offsets = [48, 128], sizes = [16, 128], strides = [1, 1]} : vector<128x256xf32> to vector<16x128xf32>
    %78 = arith.truncf %74 : vector<16x128xf32> to vector<16x128xbf16>
    %c0_37 = arith.constant 0 : index
    %c0_38 = arith.constant 0 : index
    %79 = vector.load %arg4[%c0_37, %c0_38] : memref<128x128xbf16, #tpu.memory_space<vmem>>, vector<128x128xbf16>
    %cst_39 = arith.constant dense<0.000000e+00> : vector<16x128xf32>
    %80 = tpu.matmul %78, %79, %cst_39 {dimension_numbers = #tpu.dot_dimension_numbers<[1], [0], [0], [1], [0, 0, 1, 1], [], []>} : vector<16x128xbf16>, vector<128x128xbf16>, vector<16x128xf32> -> vector<16x128xf32>
    %81 = arith.addf %77, %80 : vector<16x128xf32>
    %cst_40 = arith.constant 5.000000e-01 : f32
    %82 = vector.broadcast %cst_40 : f32 to vector<16x128xf32>
    %83 = arith.mulf %82, %81 : vector<16x128xf32>
    %84 = math.tanh %83 : vector<16x128xf32>
    %cst_41 = arith.constant 1.000000e+00 : f32
    %85 = vector.broadcast %cst_41 : f32 to vector<16x128xf32>
    %86 = arith.addf %84, %85 : vector<16x128xf32>
    %cst_42 = arith.constant 5.000000e-01 : f32
    %87 = vector.broadcast %cst_42 : f32 to vector<16x128xf32>
    %88 = arith.mulf %87, %86 : vector<16x128xf32>
    %89 = arith.mulf %88, %74 : vector<16x128xf32>
    %90 = arith.truncf %89 : vector<16x128xf32> to vector<16x128xbf16>
    %c0_43 = arith.constant 0 : index
    %c0_44 = arith.constant 0 : index
    %91 = vector.load %arg3[%c0_43, %c0_44] : memref<128x128xbf16, #tpu.memory_space<vmem>>, vector<128x128xbf16>
    %cst_45 = arith.constant dense<0.000000e+00> : vector<16x128xf32>
    %92 = tpu.matmul %90, %91, %cst_45 {dimension_numbers = #tpu.dot_dimension_numbers<[1], [0], [0], [1], [0, 0, 1, 1], [], []>} : vector<16x128xbf16>, vector<128x128xbf16>, vector<16x128xf32> -> vector<16x128xf32>
    %93 = arith.addf %76, %92 : vector<16x128xf32>
    %94 = math.tanh %93 : vector<16x128xf32>
    %95 = arith.subf %74, %94 : vector<16x128xf32>
    %96 = arith.mulf %88, %95 : vector<16x128xf32>
    %97 = arith.addf %94, %96 : vector<16x128xf32>
    %c48 = arith.constant 48 : index
    %c0_46 = arith.constant 0 : index
    %98 = vector.load %arg5[%c48, %c0_46] : memref<128x128xf32, #tpu.memory_space<vmem>>, vector<16x128xf32>
    tpu.vector_store %arg5[%c48, %c0_46], %97 {strides = array<i32>} : memref<128x128xf32, #tpu.memory_space<vmem>>, vector<16x128xf32>,
    %99 = vector.extract_strided_slice %5 {offsets = [64, 0], sizes = [16, 128], strides = [1, 1]} : vector<128x256xf32> to vector<16x128xf32>
    %100 = vector.extract_strided_slice %5 {offsets = [64, 128], sizes = [16, 128], strides = [1, 1]} : vector<128x256xf32> to vector<16x128xf32>
    %101 = arith.truncf %97 : vector<16x128xf32> to vector<16x128xbf16>
    %c0_47 = arith.constant 0 : index
    %c0_48 = arith.constant 0 : index
    %102 = vector.load %arg4[%c0_47, %c0_48] : memref<128x128xbf16, #tpu.memory_space<vmem>>, vector<128x128xbf16>
    %cst_49 = arith.constant dense<0.000000e+00> : vector<16x128xf32>
    %103 = tpu.matmul %101, %102, %cst_49 {dimension_numbers = #tpu.dot_dimension_numbers<[1], [0], [0], [1], [0, 0, 1, 1], [], []>} : vector<16x128xbf16>, vector<128x128xbf16>, vector<16x128xf32> -> vector<16x128xf32>
    %104 = arith.addf %100, %103 : vector<16x128xf32>
    %cst_50 = arith.constant 5.000000e-01 : f32
    %105 = vector.broadcast %cst_50 : f32 to vector<16x128xf32>
    %106 = arith.mulf %105, %104 : vector<16x128xf32>
    %107 = math.tanh %106 : vector<16x128xf32>
    %cst_51 = arith.constant 1.000000e+00 : f32
    %108 = vector.broadcast %cst_51 : f32 to vector<16x128xf32>
    %109 = arith.addf %107, %108 : vector<16x128xf32>
    %cst_52 = arith.constant 5.000000e-01 : f32
    %110 = vector.broadcast %cst_52 : f32 to vector<16x128xf32>
    %111 = arith.mulf %110, %109 : vector<16x128xf32>
    %112 = arith.mulf %111, %97 : vector<16x128xf32>
    %113 = arith.truncf %112 : vector<16x128xf32> to vector<16x128xbf16>
    %c0_53 = arith.constant 0 : index
    %c0_54 = arith.constant 0 : index
    %114 = vector.load %arg3[%c0_53, %c0_54] : memref<128x128xbf16, #tpu.memory_space<vmem>>, vector<128x128xbf16>
    %cst_55 = arith.constant dense<0.000000e+00> : vector<16x128xf32>
    %115 = tpu.matmul %113, %114, %cst_55 {dimension_numbers = #tpu.dot_dimension_numbers<[1], [0], [0], [1], [0, 0, 1, 1], [], []>} : vector<16x128xbf16>, vector<128x128xbf16>, vector<16x128xf32> -> vector<16x128xf32>
    %116 = arith.addf %99, %115 : vector<16x128xf32>
    %117 = math.tanh %116 : vector<16x128xf32>
    %118 = arith.subf %97, %117 : vector<16x128xf32>
    %119 = arith.mulf %111, %118 : vector<16x128xf32>
    %120 = arith.addf %117, %119 : vector<16x128xf32>
    %c64 = arith.constant 64 : index
    %c0_56 = arith.constant 0 : index
    %121 = vector.load %arg5[%c64, %c0_56] : memref<128x128xf32, #tpu.memory_space<vmem>>, vector<16x128xf32>
    tpu.vector_store %arg5[%c64, %c0_56], %120 {strides = array<i32>} : memref<128x128xf32, #tpu.memory_space<vmem>>, vector<16x128xf32>,
    %122 = vector.extract_strided_slice %5 {offsets = [80, 0], sizes = [16, 128], strides = [1, 1]} : vector<128x256xf32> to vector<16x128xf32>
    %123 = vector.extract_strided_slice %5 {offsets = [80, 128], sizes = [16, 128], strides = [1, 1]} : vector<128x256xf32> to vector<16x128xf32>
    %124 = arith.truncf %120 : vector<16x128xf32> to vector<16x128xbf16>
    %c0_57 = arith.constant 0 : index
    %c0_58 = arith.constant 0 : index
    %125 = vector.load %arg4[%c0_57, %c0_58] : memref<128x128xbf16, #tpu.memory_space<vmem>>, vector<128x128xbf16>
    %cst_59 = arith.constant dense<0.000000e+00> : vector<16x128xf32>
    %126 = tpu.matmul %124, %125, %cst_59 {dimension_numbers = #tpu.dot_dimension_numbers<[1], [0], [0], [1], [0, 0, 1, 1], [], []>} : vector<16x128xbf16>, vector<128x128xbf16>, vector<16x128xf32> -> vector<16x128xf32>
    %127 = arith.addf %123, %126 : vector<16x128xf32>
    %cst_60 = arith.constant 5.000000e-01 : f32
    %128 = vector.broadcast %cst_60 : f32 to vector<16x128xf32>
    %129 = arith.mulf %128, %127 : vector<16x128xf32>
    %130 = math.tanh %129 : vector<16x128xf32>
    %cst_61 = arith.constant 1.000000e+00 : f32
    %131 = vector.broadcast %cst_61 : f32 to vector<16x128xf32>
    %132 = arith.addf %130, %131 : vector<16x128xf32>
    %cst_62 = arith.constant 5.000000e-01 : f32
    %133 = vector.broadcast %cst_62 : f32 to vector<16x128xf32>
    %134 = arith.mulf %133, %132 : vector<16x128xf32>
    %135 = arith.mulf %134, %120 : vector<16x128xf32>
    %136 = arith.truncf %135 : vector<16x128xf32> to vector<16x128xbf16>
    %c0_63 = arith.constant 0 : index
    %c0_64 = arith.constant 0 : index
    %137 = vector.load %arg3[%c0_63, %c0_64] : memref<128x128xbf16, #tpu.memory_space<vmem>>, vector<128x128xbf16>
    %cst_65 = arith.constant dense<0.000000e+00> : vector<16x128xf32>
    %138 = tpu.matmul %136, %137, %cst_65 {dimension_numbers = #tpu.dot_dimension_numbers<[1], [0], [0], [1], [0, 0, 1, 1], [], []>} : vector<16x128xbf16>, vector<128x128xbf16>, vector<16x128xf32> -> vector<16x128xf32>
    %139 = arith.addf %122, %138 : vector<16x128xf32>
    %140 = math.tanh %139 : vector<16x128xf32>
    %141 = arith.subf %120, %140 : vector<16x128xf32>
    %142 = arith.mulf %134, %141 : vector<16x128xf32>
    %143 = arith.addf %140, %142 : vector<16x128xf32>
    %c80 = arith.constant 80 : index
    %c0_66 = arith.constant 0 : index
    %144 = vector.load %arg5[%c80, %c0_66] : memref<128x128xf32, #tpu.memory_space<vmem>>, vector<16x128xf32>
    tpu.vector_store %arg5[%c80, %c0_66], %143 {strides = array<i32>} : memref<128x128xf32, #tpu.memory_space<vmem>>, vector<16x128xf32>,
    %145 = vector.extract_strided_slice %5 {offsets = [96, 0], sizes = [16, 128], strides = [1, 1]} : vector<128x256xf32> to vector<16x128xf32>
    %146 = vector.extract_strided_slice %5 {offsets = [96, 128], sizes = [16, 128], strides = [1, 1]} : vector<128x256xf32> to vector<16x128xf32>
    %147 = arith.truncf %143 : vector<16x128xf32> to vector<16x128xbf16>
    %c0_67 = arith.constant 0 : index
    %c0_68 = arith.constant 0 : index
    %148 = vector.load %arg4[%c0_67, %c0_68] : memref<128x128xbf16, #tpu.memory_space<vmem>>, vector<128x128xbf16>
    %cst_69 = arith.constant dense<0.000000e+00> : vector<16x128xf32>
    %149 = tpu.matmul %147, %148, %cst_69 {dimension_numbers = #tpu.dot_dimension_numbers<[1], [0], [0], [1], [0, 0, 1, 1], [], []>} : vector<16x128xbf16>, vector<128x128xbf16>, vector<16x128xf32> -> vector<16x128xf32>
    %150 = arith.addf %146, %149 : vector<16x128xf32>
    %cst_70 = arith.constant 5.000000e-01 : f32
    %151 = vector.broadcast %cst_70 : f32 to vector<16x128xf32>
    %152 = arith.mulf %151, %150 : vector<16x128xf32>
    %153 = math.tanh %152 : vector<16x128xf32>
    %cst_71 = arith.constant 1.000000e+00 : f32
    %154 = vector.broadcast %cst_71 : f32 to vector<16x128xf32>
    %155 = arith.addf %153, %154 : vector<16x128xf32>
    %cst_72 = arith.constant 5.000000e-01 : f32
    %156 = vector.broadcast %cst_72 : f32 to vector<16x128xf32>
    %157 = arith.mulf %156, %155 : vector<16x128xf32>
    %158 = arith.mulf %157, %143 : vector<16x128xf32>
    %159 = arith.truncf %158 : vector<16x128xf32> to vector<16x128xbf16>
    %c0_73 = arith.constant 0 : index
    %c0_74 = arith.constant 0 : index
    %160 = vector.load %arg3[%c0_73, %c0_74] : memref<128x128xbf16, #tpu.memory_space<vmem>>, vector<128x128xbf16>
    %cst_75 = arith.constant dense<0.000000e+00> : vector<16x128xf32>
    %161 = tpu.matmul %159, %160, %cst_75 {dimension_numbers = #tpu.dot_dimension_numbers<[1], [0], [0], [1], [0, 0, 1, 1], [], []>} : vector<16x128xbf16>, vector<128x128xbf16>, vector<16x128xf32> -> vector<16x128xf32>
    %162 = arith.addf %145, %161 : vector<16x128xf32>
    %163 = math.tanh %162 : vector<16x128xf32>
    %164 = arith.subf %143, %163 : vector<16x128xf32>
    %165 = arith.mulf %157, %164 : vector<16x128xf32>
    %166 = arith.addf %163, %165 : vector<16x128xf32>
    %c96 = arith.constant 96 : index
    %c0_76 = arith.constant 0 : index
    %167 = vector.load %arg5[%c96, %c0_76] : memref<128x128xf32, #tpu.memory_space<vmem>>, vector<16x128xf32>
    tpu.vector_store %arg5[%c96, %c0_76], %166 {strides = array<i32>} : memref<128x128xf32, #tpu.memory_space<vmem>>, vector<16x128xf32>,
    %168 = vector.extract_strided_slice %5 {offsets = [112, 0], sizes = [16, 128], strides = [1, 1]} : vector<128x256xf32> to vector<16x128xf32>
    %169 = vector.extract_strided_slice %5 {offsets = [112, 128], sizes = [16, 128], strides = [1, 1]} : vector<128x256xf32> to vector<16x128xf32>
    %170 = arith.truncf %166 : vector<16x128xf32> to vector<16x128xbf16>
    %c0_77 = arith.constant 0 : index
    %c0_78 = arith.constant 0 : index
    %171 = vector.load %arg4[%c0_77, %c0_78] : memref<128x128xbf16, #tpu.memory_space<vmem>>, vector<128x128xbf16>
    %cst_79 = arith.constant dense<0.000000e+00> : vector<16x128xf32>
    %172 = tpu.matmul %170, %171, %cst_79 {dimension_numbers = #tpu.dot_dimension_numbers<[1], [0], [0], [1], [0, 0, 1, 1], [], []>} : vector<16x128xbf16>, vector<128x128xbf16>, vector<16x128xf32> -> vector<16x128xf32>
    %173 = arith.addf %169, %172 : vector<16x128xf32>
    %cst_80 = arith.constant 5.000000e-01 : f32
    %174 = vector.broadcast %cst_80 : f32 to vector<16x128xf32>
    %175 = arith.mulf %174, %173 : vector<16x128xf32>
    %176 = math.tanh %175 : vector<16x128xf32>
    %cst_81 = arith.constant 1.000000e+00 : f32
    %177 = vector.broadcast %cst_81 : f32 to vector<16x128xf32>
    %178 = arith.addf %176, %177 : vector<16x128xf32>
    %cst_82 = arith.constant 5.000000e-01 : f32
    %179 = vector.broadcast %cst_82 : f32 to vector<16x128xf32>
    %180 = arith.mulf %179, %178 : vector<16x128xf32>
    %181 = arith.mulf %180, %166 : vector<16x128xf32>
    %182 = arith.truncf %181 : vector<16x128xf32> to vector<16x128xbf16>
    %c0_83 = arith.constant 0 : index
    %c0_84 = arith.constant 0 : index
    %183 = vector.load %arg3[%c0_83, %c0_84] : memref<128x128xbf16, #tpu.memory_space<vmem>>, vector<128x128xbf16>
    %cst_85 = arith.constant dense<0.000000e+00> : vector<16x128xf32>
    %184 = tpu.matmul %182, %183, %cst_85 {dimension_numbers = #tpu.dot_dimension_numbers<[1], [0], [0], [1], [0, 0, 1, 1], [], []>} : vector<16x128xbf16>, vector<128x128xbf16>, vector<16x128xf32> -> vector<16x128xf32>
    %185 = arith.addf %168, %184 : vector<16x128xf32>
    %186 = math.tanh %185 : vector<16x128xf32>
    %187 = arith.subf %166, %186 : vector<16x128xf32>
    %188 = arith.mulf %180, %187 : vector<16x128xf32>
    %189 = arith.addf %186, %188 : vector<16x128xf32>
    %c112 = arith.constant 112 : index
    %c0_86 = arith.constant 0 : index
    %190 = vector.load %arg5[%c112, %c0_86] : memref<128x128xf32, #tpu.memory_space<vmem>>, vector<16x128xf32>
    tpu.vector_store %arg5[%c112, %c0_86], %189 {strides = array<i32>} : memref<128x128xf32, #tpu.memory_space<vmem>>, vector<16x128xf32>,
    return
  }
}

</mosaic_0001>

<llo_original>
// kernel: tpu_custom_call.1
$region0: #{tpu_custom_call.1}
  #allocation0 [shape = 'u32[]', space=smem, size = 0x4, offset = 0x4, fixed_abs, tag = 'smem constant byte address 0x4 - core index']
  #allocation1 [shape = 'u32[72,128]{1,0:T(1,128)}', space=vmem, size = 0x9000, scoped, tag = 'internal scratch']
  %s0 = inlined_call_operand.hbm [shape: bf16[128,128], index: 0, kind: input, shape index: {}]
  %s1 = inlined_call_operand.hbm [shape: bf16[128,256], index: 1, kind: input, shape index: {}]
  %s2 = inlined_call_operand.hbm [shape: f32[1,256], index: 2, kind: input, shape index: {}]
  %s3 = inlined_call_operand.hbm [shape: bf16[128,128], index: 3, kind: input, shape index: {}]
  %s4 = inlined_call_operand.hbm [shape: bf16[128,128], index: 4, kind: input, shape index: {}]
  %s5 = inlined_call_operand.hbm [shape: f32[128,128], index: 5, kind: output, shape index: {}]
  %s6 = sld [smem:[#allocation0]]
  $region50: #{tpu_custom_call.1} parent=0
    _
  %s8 = ssub.s32 1, %s6
  %s9 = scalar_select 0, %s8, %s6
  $region1: #{tpu_custom_call.1} parent=0
    #allocation2 [shape = 'u8[32768]{0}', space=vmem, size = 0x8000, scoped, tag = 'input window, operand 0, single buffered']
    #allocation3 [shape = 's32[1]{0}', space=sflag, size = 0x4, scoped, tag = 'scoped memory for tpu_custom_call.1']
    #allocation4 [shape = 's32[1]{0}', space=sflag, size = 0x4, scoped, tag = 'scoped memory for tpu_custom_call.1']
    #allocation5 [shape = 'u8[65536]{0}', space=vmem, size = 0x10000, scoped, tag = 'input window, operand 1, single buffered']
    #allocation6 [shape = 's32[1]{0}', space=sflag, size = 0x4, scoped, tag = 'scoped memory for tpu_custom_call.1']
    #allocation7 [shape = 'u8[1024]{0}', space=vmem, size = 0x400, scoped, tag = 'input window, operand 2, single buffered']
    #allocation8 [shape = 'u8[32768]{0}', space=vmem, size = 0x8000, scoped, tag = 'input window, operand 3, single buffered']
    #allocation9 [shape = 's32[1]{0}', space=sflag, size = 0x4, scoped, tag = 'scoped memory for tpu_custom_call.1']
    #allocation10 [shape = 'u8[32768]{0}', space=vmem, size = 0x8000, scoped, tag = 'input window, operand 4, single buffered']
    #allocation11 [shape = 'u8[65536]{0}', space=vmem, size = 0x10000, scoped, tag = 'output window, operand 0, single buffered']
    %10 = vsyncpa [#allocation3], 0
    %11 = vsyncpa [#allocation6], 0
    %12 = vsyncpa [#allocation9], 0
    %13 = vsyncpa [#allocation4], 0
    // Predicated region
    $region2: #{tpu_custom_call.1} parent=1 // pred_check
      _
    $region3: #{tpu_custom_call.1} parent=1 // pred_check_branch
      %15 = sbr.rel (0) target = $region5
    $region4: #{tpu_custom_call.1} parent=1 // pred_region
      %17 = vsyncadd [#allocation3], 0
      %s18 = sshll.u32 %s0, 4
      %s19 = int_to_ptr.hbm [resolvable:$true] %s18
      %s20 = sshll.u32 [#allocation2], 4
      %s21 = int_to_ptr.vmem [resolvable:$true] %s20
      %26 = dma.hbm_to_vmem [thread:$0]  %s19, 1024, %s21, [#allocation3], 64, 64, 4
    $region5: #{tpu_custom_call.1} parent=1 // pred_fallthru
      _
    // Predicated region
    $region6: #{tpu_custom_call.1} parent=1 // pred_check
      _
    $region7: #{tpu_custom_call.1} parent=1 // pred_check_branch
      %28 = sbr.rel (0) target = $region9
    $region8: #{tpu_custom_call.1} parent=1 // pred_region
      %30 = vsyncadd [#allocation6], 0
      %s31 = sshll.u32 %s1, 4
      %s32 = int_to_ptr.hbm [resolvable:$true] %s31
      %s33 = sshll.u32 [#allocation5], 4
      %s34 = int_to_ptr.vmem [resolvable:$true] %s33
      %39 = dma.hbm_to_vmem [thread:$0]  %s32, 2048, %s34, [#allocation6], 128, 128, 8
    $region9: #{tpu_custom_call.1} parent=1 // pred_fallthru
      _
    // Predicated region
    $region10: #{tpu_custom_call.1} parent=1 // pred_check
      _
    $region11: #{tpu_custom_call.1} parent=1 // pred_check_branch
      %41 = sbr.rel (0) target = $region13
    $region12: #{tpu_custom_call.1} parent=1 // pred_region
      %43 = vsyncadd [#allocation6], 0
      %s45 = sshll.u32 %s2, 4
      %s46 = int_to_ptr.hbm [resolvable:$true] %s45
      %s47 = sshll.u32 [#allocation7], 4
      %s48 = int_to_ptr.vmem [resolvable:$true] %s47
      %50 = dma.hbm_to_vmem [thread:$0]  %s46, 32, %s48, [#allocation6]
    $region13: #{tpu_custom_call.1} parent=1 // pred_fallthru
      _
    // Predicated region
    $region14: #{tpu_custom_call.1} parent=1 // pred_check
      _
    $region15: #{tpu_custom_call.1} parent=1 // pred_check_branch
      %52 = sbr.rel (0) target = $region17
    $region16: #{tpu_custom_call.1} parent=1 // pred_region
      %54 = vsyncadd [#allocation9], 0
      %s55 = sshll.u32 %s3, 4
      %s56 = int_to_ptr.hbm [resolvable:$true] %s55
      %s57 = sshll.u32 [#allocation8], 4
      %s58 = int_to_ptr.vmem [resolvable:$true] %s57
      %63 = dma.hbm_to_vmem [thread:$0]  %s56, 1024, %s58, [#allocation9], 64, 64, 4
    $region17: #{tpu_custom_call.1} parent=1 // pred_fallthru
      _
    // Predicated region
    $region18: #{tpu_custom_call.1} parent=1 // pred_check
      _
    $region19: #{tpu_custom_call.1} parent=1 // pred_check_branch
      %65 = sbr.rel (0) target = $region21
    $region20: #{tpu_custom_call.1} parent=1 // pred_region
      %67 = vsyncadd [#allocation9], 0
      %s68 = sshll.u32 %s4, 4
      %s69 = int_to_ptr.hbm [resolvable:$true] %s68
      %s70 = sshll.u32 [#allocation10], 4
      %s71 = int_to_ptr.vmem [resolvable:$true] %s70
      %76 = dma.hbm_to_vmem [thread:$0]  %s69, 1024, %s71, [#allocation9], 64, 64, 4
    $region21: #{tpu_custom_call.1} parent=1 // pred_fallthru
      _
    // Predicated region
    $region22: #{tpu_custom_call.1} parent=1 // pred_check
      _
    $region23: #{tpu_custom_call.1} parent=1 // pred_check_branch
      %78 = sbr.rel (0) target = $region25
    $region24: #{tpu_custom_call.1} parent=1 // pred_region
      %80 = dma.done [#allocation3], 1024
    $region25: #{tpu_custom_call.1} parent=1 // pred_fallthru
      _
    // Predicated region
    $region26: #{tpu_custom_call.1} parent=1 // pred_check
      _
    $region27: #{tpu_custom_call.1} parent=1 // pred_check_branch
      %82 = sbr.rel (0) target = $region29
    $region28: #{tpu_custom_call.1} parent=1 // pred_region
      %84 = dma.done [#allocation6], 2048
    $region29: #{tpu_custom_call.1} parent=1 // pred_fallthru
      _
    // Predicated region
    $region30: #{tpu_custom_call.1} parent=1 // pred_check
      _
    $region31: #{tpu_custom_call.1} parent=1 // pred_check_branch
      %86 = sbr.rel (0) target = $region33
    $region32: #{tpu_custom_call.1} parent=1 // pred_region
      %88 = dma.done [#allocation6], 32
    $region33: #{tpu_custom_call.1} parent=1 // pred_fallthru
      _
    // Predicated region
    $region34: #{tpu_custom_call.1} parent=1 // pred_check
      _
    $region35: #{tpu_custom_call.1} parent=1 // pred_check_branch
      %90 = sbr.rel (0) target = $region37
    $region36: #{tpu_custom_call.1} parent=1 // pred_region
      %92 = dma.done [#allocation9], 1024
    $region37: #{tpu_custom_call.1} parent=1 // pred_fallthru
      _
    // Predicated region
    $region38: #{tpu_custom_call.1} parent=1 // pred_check
      _
    $region39: #{tpu_custom_call.1} parent=1 // pred_check_branch
      %94 = sbr.rel (0) target = $region41
    $region40: #{tpu_custom_call.1} parent=1 // pred_region
      %96 = dma.done [#allocation9], 1024
    $region41: #{tpu_custom_call.1} parent=1 // pred_fallthru
      _
    %v98 = vld [vmem:[#allocation2] sm:$0xf]
    %v99 = vld [vmem:[#allocation2 + $0x4] sm:$0xf]
    %v100 = vld [vmem:[#allocation2 + $0x8] sm:$0xf]
    %v101 = vld [vmem:[#allocation2 + $0xc] sm:$0xf]
    %v102 = vld [vmem:[#allocation2 + $0x10] sm:$0xf]
    %v103 = vld [vmem:[#allocation2 + $0x14] sm:$0xf]
    %v104 = vld [vmem:[#allocation2 + $0x18] sm:$0xf]
    %v105 = vld [vmem:[#allocation2 + $0x1c] sm:$0xf]
    %v106 = vld [vmem:[#allocation2 + $0x20] sm:$0xf]
    %v107 = vld [vmem:[#allocation2 + $0x24] sm:$0xf]
    %v108 = vld [vmem:[#allocation2 + $0x28] sm:$0xf]
    %v109 = vld [vmem:[#allocation2 + $0x2c] sm:$0xf]
    %v110 = vld [vmem:[#allocation2 + $0x30] sm:$0xf]
    %v111 = vld [vmem:[#allocation2 + $0x34] sm:$0xf]
    %v112 = vld [vmem:[#allocation2 + $0x38] sm:$0xf]
    %v113 = vld [vmem:[#allocation2 + $0x3c] sm:$0xf]
    %v114 = vld [vmem:[#allocation5] sm:$0xff]
    %v115 = vld [vmem:[#allocation5 + $0x8] sm:$0xff]
    %v116 = vld [vmem:[#allocation5 + $0x10] sm:$0xff]
    %v117 = vld [vmem:[#allocation5 + $0x18] sm:$0xff]
    %v118 = vld [vmem:[#allocation5 + $0x20] sm:$0xff]
    %v119 = vld [vmem:[#allocation5 + $0x28] sm:$0xff]
    %v120 = vld [vmem:[#allocation5 + $0x30] sm:$0xff]
    %v121 = vld [vmem:[#allocation5 + $0x38] sm:$0xff]
    %v122 = vld [vmem:[#allocation5 + $0x40] sm:$0xff]
    %v123 = vld [vmem:[#allocation5 + $0x48] sm:$0xff]
    %v124 = vld [vmem:[#allocation5 + $0x50] sm:$0xff]
    %v125 = vld [vmem:[#allocation5 + $0x58] sm:$0xff]
    %v126 = vld [vmem:[#allocation5 + $0x60] sm:$0xff]
    %v127 = vld [vmem:[#allocation5 + $0x68] sm:$0xff]
    %v128 = vld [vmem:[#allocation5 + $0x70] sm:$0xff]
    %v129 = vld [vmem:[#allocation5 + $0x78] sm:$0xff]
    %v130 = vld [vmem:[#allocation7] sm:$0x3]
    %v132 = vperm.slane %v130, 0
    %v133 = vperm.slane %v130, 1
    %v152 = vunpack.c.l.b16 %v98
    %v153 = vunpack.c.l.b16 %v99
    %v154 = vunpack.c.l.b16 %v100
    %v155 = vunpack.c.l.b16 %v101
    %v156 = vunpack.c.l.b16 %v102
    %v157 = vunpack.c.l.b16 %v103
    %v158 = vunpack.c.l.b16 %v104
    %v159 = vunpack.c.l.b16 %v105
    %v160 = vunpack.c.l.b16 %v106
    %v161 = vunpack.c.l.b16 %v107
    %v162 = vunpack.c.l.b16 %v108
    %v163 = vunpack.c.l.b16 %v109
    %v164 = vunpack.c.l.b16 %v110
    %v165 = vunpack.c.l.b16 %v111
    %v166 = vunpack.c.l.b16 %v112
    %v167 = vunpack.c.l.b16 %v113
    %v168 = vpack.c.b16 %v153, %v152
    %v169 = vpack.c.b16 %v155, %v154
    %v170 = vpack.c.b16 %v157, %v156
    %v171 = vpack.c.b16 %v159, %v158
    %v172 = vpack.c.b16 %v161, %v160
    %v173 = vpack.c.b16 %v163, %v162
    %v174 = vpack.c.b16 %v165, %v164
    %v175 = vpack.c.b16 %v167, %v166
    %v200 = vunpack.c.l.b16 %v114
    %v201 = vunpack.c.h.b16 %v114
    %v202 = vunpack.c.l.b16 %v115
    %v203 = vunpack.c.h.b16 %v115
    %v204 = vunpack.c.l.b16 %v116
    %v205 = vunpack.c.h.b16 %v116
    %v206 = vunpack.c.l.b16 %v117
    %v207 = vunpack.c.h.b16 %v117
    %v208 = vunpack.c.l.b16 %v118
    %v209 = vunpack.c.h.b16 %v118
    %v210 = vunpack.c.l.b16 %v119
    %v211 = vunpack.c.h.b16 %v119
    %v212 = vunpack.c.l.b16 %v120
    %v213 = vunpack.c.h.b16 %v120
    %v214 = vunpack.c.l.b16 %v121
    %v215 = vunpack.c.h.b16 %v121
    %v216 = vunpack.c.l.b16 %v122
    %v217 = vunpack.c.h.b16 %v122
    %v218 = vunpack.c.l.b16 %v123
    %v219 = vunpack.c.h.b16 %v123
    %v220 = vunpack.c.l.b16 %v124
    %v221 = vunpack.c.h.b16 %v124
    %v222 = vunpack.c.l.b16 %v125
    %v223 = vunpack.c.h.b16 %v125
    %v224 = vunpack.c.l.b16 %v126
    %v225 = vunpack.c.h.b16 %v126
    %v226 = vunpack.c.l.b16 %v127
    %v227 = vunpack.c.h.b16 %v127
    %v228 = vunpack.c.l.b16 %v128
    %v229 = vunpack.c.h.b16 %v128
    %v230 = vunpack.c.l.b16 %v129
    %v231 = vunpack.c.h.b16 %v129
    %v232 = vpack.c.b16 %v202, %v200
    %v233 = vpack.c.b16 %v203, %v201
    %v234 = vpack.c.b16 %v206, %v204
    %v235 = vpack.c.b16 %v207, %v205
    %v236 = vpack.c.b16 %v210, %v208
    %v237 = vpack.c.b16 %v211, %v209
    %v238 = vpack.c.b16 %v214, %v212
    %v239 = vpack.c.b16 %v215, %v213
    %v240 = vpack.c.b16 %v218, %v216
    %v241 = vpack.c.b16 %v219, %v217
    %v242 = vpack.c.b16 %v222, %v220
    %v243 = vpack.c.b16 %v223, %v221
    %v244 = vpack.c.b16 %v226, %v224
    %v245 = vpack.c.b16 %v227, %v225
    %v246 = vpack.c.b16 %v230, %v228
    %v247 = vpack.c.b16 %v231, %v229
    %264 = vmatpush.bf16.msra.mxu0 %v246
    %265 = vmatpush.bf16.msra.mxu0 %v244
    %266 = vmatpush.bf16.msra.mxu0 %v242
    %267 = vmatpush.bf16.msra.mxu0 %v240
    %268 = vmatpush.bf16.msra.mxu0 %v238
    %269 = vmatpush.bf16.msra.mxu0 %v236
    %270 = vmatpush.bf16.msra.mxu0 %v234
    %271 = vmatpush.bf16.msra.mxu0 %v232
    %272 = vmatmul.bf16.gmra.mxu0 %v168
    %v273 = vpop.f32.mrf.mxu0
    %v274 = vadd.f32 %v132, %v273
    %v275 = vpop.f32.mrf.mxu0
    %v276 = vadd.f32 %v132, %v275
    %277 = vmatmul.bf16.gmra.mxu0 %v169
    %v278 = vpop.f32.mrf.mxu0
    %v279 = vadd.f32 %v132, %v278
    %v280 = vpop.f32.mrf.mxu0
    %v281 = vadd.f32 %v132, %v280
    %282 = vmatmul.bf16.gmra.mxu0 %v170
    %v283 = vpop.f32.mrf.mxu0
    %v284 = vadd.f32 %v132, %v283
    %v285 = vpop.f32.mrf.mxu0
    %v286 = vadd.f32 %v132, %v285
    %287 = vmatmul.bf16.gmra.mxu0 %v171
    %v288 = vpop.f32.mrf.mxu0
    %v289 = vadd.f32 %v132, %v288
    %v290 = vpop.f32.mrf.mxu0
    %v291 = vadd.f32 %v132, %v290
    %292 = vmatmul.bf16.gmra.mxu0 %v172
    %v293 = vpop.f32.mrf.mxu0
    %v294 = vadd.f32 %v132, %v293
    %v295 = vpop.f32.mrf.mxu0
    %v296 = vadd.f32 %v132, %v295
    %297 = vmatmul.bf16.gmra.mxu0 %v173
    %v298 = vpop.f32.mrf.mxu0
    %v299 = vadd.f32 %v132, %v298
    %v300 = vpop.f32.mrf.mxu0
    %v301 = vadd.f32 %v132, %v300
    %302 = vmatmul.bf16.gmra.mxu0 %v174
    %v303 = vpop.f32.mrf.mxu0
    %v304 = vadd.f32 %v132, %v303
    %v305 = vpop.f32.mrf.mxu0
    %v306 = vadd.f32 %v132, %v305
    %307 = vmatmul.bf16.gmra.mxu0 %v175
    %v308 = vpop.f32.mrf.mxu0
    %v309 = vadd.f32 %v132, %v308
    %v310 = vpop.f32.mrf.mxu0
    %v311 = vadd.f32 %v132, %v310
    %312 = vdwg.mxu0
    %313 = vmatpush.bf16.msra.mxu0 %v247
    %314 = vmatpush.bf16.msra.mxu0 %v245
    %315 = vmatpush.bf16.msra.mxu0 %v243
    %316 = vmatpush.bf16.msra.mxu0 %v241
    %317 = vmatpush.bf16.msra.mxu0 %v239
    %318 = vmatpush.bf16.msra.mxu0 %v237
    %319 = vmatpush.bf16.msra.mxu0 %v235
    %320 = vmatpush.bf16.msra.mxu0 %v233
    %321 = vmatmul.bf16.gmra.mxu0 %v168
    %v322 = vpop.f32.mrf.mxu0
    %v323 = vadd.f32 %v133, %v322
    %v324 = vpop.f32.mrf.mxu0
    %v325 = vadd.f32 %v133, %v324
    %326 = vmatmul.bf16.gmra.mxu0 %v169
    %v327 = vpop.f32.mrf.mxu0
    %v328 = vadd.f32 %v133, %v327
    %v329 = vpop.f32.mrf.mxu0
    %v330 = vadd.f32 %v133, %v329
    %331 = vmatmul.bf16.gmra.mxu0 %v170
    %v332 = vpop.f32.mrf.mxu0
    %v333 = vadd.f32 %v133, %v332
    %v334 = vpop.f32.mrf.mxu0
    %v335 = vadd.f32 %v133, %v334
    %336 = vmatmul.bf16.gmra.mxu0 %v171
    %v337 = vpop.f32.mrf.mxu0
    %v338 = vadd.f32 %v133, %v337
    %v339 = vpop.f32.mrf.mxu0
    %v340 = vadd.f32 %v133, %v339
    %341 = vmatmul.bf16.gmra.mxu0 %v172
    %v342 = vpop.f32.mrf.mxu0
    %v343 = vadd.f32 %v133, %v342
    %v344 = vpop.f32.mrf.mxu0
    %v345 = vadd.f32 %v133, %v344
    %346 = vmatmul.bf16.gmra.mxu0 %v173
    %v347 = vpop.f32.mrf.mxu0
    %v348 = vadd.f32 %v133, %v347
    %v349 = vpop.f32.mrf.mxu0
    %v350 = vadd.f32 %v133, %v349
    %351 = vmatmul.bf16.gmra.mxu0 %v174
    %v352 = vpop.f32.mrf.mxu0
    %v353 = vadd.f32 %v133, %v352
    %v354 = vpop.f32.mrf.mxu0
    %v355 = vadd.f32 %v133, %v354
    %356 = vmatmul.bf16.gmra.mxu0 %v175
    %v357 = vpop.f32.mrf.mxu0
    %v358 = vadd.f32 %v133, %v357
    %v359 = vpop.f32.mrf.mxu0
    %v360 = vadd.f32 %v133, %v359
    %361 = vdwg.mxu0
    %v362 = vld [vmem:[#allocation10] sm:$0xf]
    %v363 = vld [vmem:[#allocation10 + $0x4] sm:$0xf]
    %v364 = vld [vmem:[#allocation10 + $0x8] sm:$0xf]
    %v365 = vld [vmem:[#allocation10 + $0xc] sm:$0xf]
    %v366 = vld [vmem:[#allocation10 + $0x10] sm:$0xf]
    %v367 = vld [vmem:[#allocation10 + $0x14] sm:$0xf]
    %v368 = vld [vmem:[#allocation10 + $0x18] sm:$0xf]
    %v369 = vld [vmem:[#allocation10 + $0x1c] sm:$0xf]
    %v370 = vld [vmem:[#allocation10 + $0x20] sm:$0xf]
    %v371 = vld [vmem:[#allocation10 + $0x24] sm:$0xf]
    %v372 = vld [vmem:[#allocation10 + $0x28] sm:$0xf]
    %v373 = vld [vmem:[#allocation10 + $0x2c] sm:$0xf]
    %v374 = vld [vmem:[#allocation10 + $0x30] sm:$0xf]
    %v375 = vld [vmem:[#allocation10 + $0x34] sm:$0xf]
    %v376 = vld [vmem:[#allocation10 + $0x38] sm:$0xf]
    %v377 = vld [vmem:[#allocation10 + $0x3c] sm:$0xf]
    %v394 = vunpack.c.l.b16 %v362
    %v395 = vunpack.c.l.b16 %v363
    %v396 = vunpack.c.l.b16 %v364
    %v397 = vunpack.c.l.b16 %v365
    %v398 = vunpack.c.l.b16 %v366
    %v399 = vunpack.c.l.b16 %v367
    %v400 = vunpack.c.l.b16 %v368
    %v401 = vunpack.c.l.b16 %v369
    %v402 = vunpack.c.l.b16 %v370
    %v403 = vunpack.c.l.b16 %v371
    %v404 = vunpack.c.l.b16 %v372
    %v405 = vunpack.c.l.b16 %v373
    %v406 = vunpack.c.l.b16 %v374
    %v407 = vunpack.c.l.b16 %v375
    %v408 = vunpack.c.l.b16 %v376
    %v409 = vunpack.c.l.b16 %v377
    %v410 = vpack.c.b16 %v395, %v394
    %v411 = vpack.c.b16 %v397, %v396
    %v412 = vpack.c.b16 %v399, %v398
    %v413 = vpack.c.b16 %v401, %v400
    %v414 = vpack.c.b16 %v403, %v402
    %v415 = vpack.c.b16 %v405, %v404
    %v416 = vpack.c.b16 %v407, %v406
    %v417 = vpack.c.b16 %v409, %v408
    %426 = vmatpush.bf16.msra.mxu0 %v417
    %427 = vmatpush.bf16.msra.mxu0 %v416
    %428 = vmatpush.bf16.msra.mxu0 %v415
    %429 = vmatpush.bf16.msra.mxu0 %v414
    %430 = vmatpush.bf16.msra.mxu0 %v413
    %431 = vmatpush.bf16.msra.mxu0 %v412
    %432 = vmatpush.bf16.msra.mxu0 %v411
    %433 = vmatpush.bf16.msra.mxu0 %v410
    %434 = vmatmul.bf16.gmra.mxu0 0
    %v435 = vpop.f32.mrf.mxu0
    %v436 = vadd.f32 0.0, %v435
    %v437 = vpop.f32.mrf.mxu0
    %v438 = vadd.f32 0.0, %v437
    %439 = vdwg.mxu0
    %v440 = vadd.f32 %v323, %v436
    %v441 = vadd.f32 %v325, %v438
    %v442 = vmul.f32 %v440, 0.5
    %v443 = vmul.f32 %v441, 0.5
    %v444 = vtanh.pop %v442
    %v445 = vtanh.pop %v443
    %v446 = vadd.f32 %v444, 1.0
    %v447 = vadd.f32 %v445, 1.0
    %v448 = vmul.f32 %v446, 0.5
    %v449 = vmul.f32 %v447, 0.5
    %v450 = vmul.f32 %v448, 0.0
    %v451 = vmul.f32 %v449, 0.0
    %v452 = vpack.c.bf16 %v451, %v450
    %v453 = vld [vmem:[#allocation8] sm:$0xf]
    %v454 = vld [vmem:[#allocation8 + $0x4] sm:$0xf]
    %v455 = vld [vmem:[#allocation8 + $0x8] sm:$0xf]
    %v456 = vld [vmem:[#allocation8 + $0xc] sm:$0xf]
    %v457 = vld [vmem:[#allocation8 + $0x10] sm:$0xf]
    %v458 = vld [vmem:[#allocation8 + $0x14] sm:$0xf]
    %v459 = vld [vmem:[#allocation8 + $0x18] sm:$0xf]
    %v460 = vld [vmem:[#allocation8 + $0x1c] sm:$0xf]
    %v461 = vld [vmem:[#allocation8 + $0x20] sm:$0xf]
    %v462 = vld [vmem:[#allocation8 + $0x24] sm:$0xf]
    %v463 = vld [vmem:[#allocation8 + $0x28] sm:$0xf]
    %v464 = vld [vmem:[#allocation8 + $0x2c] sm:$0xf]
    %v465 = vld [vmem:[#allocation8 + $0x30] sm:$0xf]
    %v466 = vld [vmem:[#allocation8 + $0x34] sm:$0xf]
    %v467 = vld [vmem:[#allocation8 + $0x38] sm:$0xf]
    %v468 = vld [vmem:[#allocation8 + $0x3c] sm:$0xf]
    %v485 = vunpack.c.l.b16 %v453
    %v486 = vunpack.c.l.b16 %v454
    %v487 = vunpack.c.l.b16 %v455
    %v488 = vunpack.c.l.b16 %v456
    %v489 = vunpack.c.l.b16 %v457
    %v490 = vunpack.c.l.b16 %v458
    %v491 = vunpack.c.l.b16 %v459
    %v492 = vunpack.c.l.b16 %v460
    %v493 = vunpack.c.l.b16 %v461
    %v494 = vunpack.c.l.b16 %v462
    %v495 = vunpack.c.l.b16 %v463
    %v496 = vunpack.c.l.b16 %v464
    %v497 = vunpack.c.l.b16 %v465
    %v498 = vunpack.c.l.b16 %v466
    %v499 = vunpack.c.l.b16 %v467
    %v500 = vunpack.c.l.b16 %v468
    %v501 = vpack.c.b16 %v486, %v485
    %v502 = vpack.c.b16 %v488, %v487
    %v503 = vpack.c.b16 %v490, %v489
    %v504 = vpack.c.b16 %v492, %v491
    %v505 = vpack.c.b16 %v494, %v493
    %v506 = vpack.c.b16 %v496, %v495
    %v507 = vpack.c.b16 %v498, %v497
    %v508 = vpack.c.b16 %v500, %v499
    %517 = vmatpush.bf16.msra.mxu0 %v508
    %518 = vmatpush.bf16.msra.mxu0 %v507
    %519 = vmatpush.bf16.msra.mxu0 %v506
    %520 = vmatpush.bf16.msra.mxu0 %v505
    %521 = vmatpush.bf16.msra.mxu0 %v504
    %522 = vmatpush.bf16.msra.mxu0 %v503
    %523 = vmatpush.bf16.msra.mxu0 %v502
    %524 = vmatpush.bf16.msra.mxu0 %v501
    %525 = vmatmul.bf16.gmra.mxu0 %v452
    %v526 = vpop.f32.mrf.mxu0
    %v527 = vadd.f32 0.0, %v526
    %v528 = vpop.f32.mrf.mxu0
    %v529 = vadd.f32 0.0, %v528
    %530 = vdwg.mxu0
    %v531 = vadd.f32 %v274, %v527
    %v532 = vadd.f32 %v276, %v529
    %v533 = vtanh.pop %v531
    %v534 = vtanh.pop %v532
    %v535 = vsub.f32 0.0, %v533
    %v536 = vsub.f32 0.0, %v534
    %v537 = vmul.f32 %v448, %v535
    %v538 = vmul.f32 %v449, %v536
    %v539 = vadd.f32 %v533, %v537
    %v540 = vadd.f32 %v534, %v538
    %541 = vst [vmem:[#allocation11] sm:$0xff] %v539
    %542 = vst [vmem:[#allocation11 + $0x8] sm:$0xff] %v540
    %v543 = vpack.c.bf16 %v540, %v539
    %v544 = vld [vmem:[#allocation10] sm:$0xf]
    %v545 = vld [vmem:[#allocation10 + $0x4] sm:$0xf]
    %v546 = vld [vmem:[#allocation10 + $0x8] sm:$0xf]
    %v547 = vld [vmem:[#allocation10 + $0xc] sm:$0xf]
    %v548 = vld [vmem:[#allocation10 + $0x10] sm:$0xf]
    %v549 = vld [vmem:[#allocation10 + $0x14] sm:$0xf]
    %v550 = vld [vmem:[#allocation10 + $0x18] sm:$0xf]
    %v551 = vld [vmem:[#allocation10 + $0x1c] sm:$0xf]
    %v552 = vld [vmem:[#allocation10 + $0x20] sm:$0xf]
    %v553 = vld [vmem:[#allocation10 + $0x24] sm:$0xf]
    %v554 = vld [vmem:[#allocation10 + $0x28] sm:$0xf]
    %v555 = vld [vmem:[#allocation10 + $0x2c] sm:$0xf]
    %v556 = vld [vmem:[#allocation10 + $0x30] sm:$0xf]
    %v557 = vld [vmem:[#allocation10 + $0x34] sm:$0xf]
    %v558 = vld [vmem:[#allocation10 + $0x38] sm:$0xf]
    %v559 = vld [vmem:[#allocation10 + $0x3c] sm:$0xf]
    %v576 = vunpack.c.l.b16 %v544
    %v577 = vunpack.c.l.b16 %v545
    %v578 = vunpack.c.l.b16 %v546
    %v579 = vunpack.c.l.b16 %v547
    %v580 = vunpack.c.l.b16 %v548
    %v581 = vunpack.c.l.b16 %v549
    %v582 = vunpack.c.l.b16 %v550
    %v583 = vunpack.c.l.b16 %v551
    %v584 = vunpack.c.l.b16 %v552
    %v585 = vunpack.c.l.b16 %v553
    %v586 = vunpack.c.l.b16 %v554
    %v587 = vunpack.c.l.b16 %v555
    %v588 = vunpack.c.l.b16 %v556
    %v589 = vunpack.c.l.b16 %v557
    %v590 = vunpack.c.l.b16 %v558
    %v591 = vunpack.c.l.b16 %v559
    %v592 = vpack.c.b16 %v577, %v576
    %v593 = vpack.c.b16 %v579, %v578
    %v594 = vpack.c.b16 %v581, %v580
    %v595 = vpack.c.b16 %v583, %v582
    %v596 = vpack.c.b16 %v585, %v584
    %v597 = vpack.c.b16 %v587, %v586
    %v598 = vpack.c.b16 %v589, %v588
    %v599 = vpack.c.b16 %v591, %v590
    %608 = vmatpush.bf16.msra.mxu0 %v599
    %609 = vmatpush.bf16.msra.mxu0 %v598
    %610 = vmatpush.bf16.msra.mxu0 %v597
    %611 = vmatpush.bf16.msra.mxu0 %v596
    %612 = vmatpush.bf16.msra.mxu0 %v595
    %613 = vmatpush.bf16.msra.mxu0 %v594
    %614 = vmatpush.bf16.msra.mxu0 %v593
    %615 = vmatpush.bf16.msra.mxu0 %v592
    %616 = vmatmul.bf16.gmra.mxu0 %v543
    %v617 = vpop.f32.mrf.mxu0
    %v618 = vadd.f32 0.0, %v617
    %v619 = vpop.f32.mrf.mxu0
    %v620 = vadd.f32 0.0, %v619
    %621 = vdwg.mxu0
    %v622 = vadd.f32 %v328, %v618
    %v623 = vadd.f32 %v330, %v620
    %v624 = vmul.f32 %v622, 0.5
    %v625 = vmul.f32 %v623, 0.5
    %v626 = vtanh.pop %v624
    %v627 = vtanh.pop %v625
    %v628 = vadd.f32 %v626, 1.0
    %v629 = vadd.f32 %v627, 1.0
    %v630 = vmul.f32 %v628, 0.5
    %v631 = vmul.f32 %v629, 0.5
    %v632 = vmul.f32 %v630, %v539
    %v633 = vmul.f32 %v631, %v540
    %v634 = vpack.c.bf16 %v633, %v632
    %v635 = vld [vmem:[#allocation8] sm:$0xf]
    %v636 = vld [vmem:[#allocation8 + $0x4] sm:$0xf]
    %v637 = vld [vmem:[#allocation8 + $0x8] sm:$0xf]
    %v638 = vld [vmem:[#allocation8 + $0xc] sm:$0xf]
    %v639 = vld [vmem:[#allocation8 + $0x10] sm:$0xf]
    %v640 = vld [vmem:[#allocation8 + $0x14] sm:$0xf]
    %v641 = vld [vmem:[#allocation8 + $0x18] sm:$0xf]
    %v642 = vld [vmem:[#allocation8 + $0x1c] sm:$0xf]
    %v643 = vld [vmem:[#allocation8 + $0x20] sm:$0xf]
    %v644 = vld [vmem:[#allocation8 + $0x24] sm:$0xf]
    %v645 = vld [vmem:[#allocation8 + $0x28] sm:$0xf]
    %v646 = vld [vmem:[#allocation8 + $0x2c] sm:$0xf]
    %v647 = vld [vmem:[#allocation8 + $0x30] sm:$0xf]
    %v648 = vld [vmem:[#allocation8 + $0x34] sm:$0xf]
    %v649 = vld [vmem:[#allocation8 + $0x38] sm:$0xf]
    %v650 = vld [vmem:[#allocation8 + $0x3c] sm:$0xf]
    %v667 = vunpack.c.l.b16 %v635
    %v668 = vunpack.c.l.b16 %v636
    %v669 = vunpack.c.l.b16 %v637
    %v670 = vunpack.c.l.b16 %v638
    %v671 = vunpack.c.l.b16 %v639
    %v672 = vunpack.c.l.b16 %v640
    %v673 = vunpack.c.l.b16 %v641
    %v674 = vunpack.c.l.b16 %v642
    %v675 = vunpack.c.l.b16 %v643
    %v676 = vunpack.c.l.b16 %v644
    %v677 = vunpack.c.l.b16 %v645
    %v678 = vunpack.c.l.b16 %v646
    %v679 = vunpack.c.l.b16 %v647
    %v680 = vunpack.c.l.b16 %v648
    %v681 = vunpack.c.l.b16 %v649
    %v682 = vunpack.c.l.b16 %v650
    %v683 = vpack.c.b16 %v668, %v667
    %v684 = vpack.c.b16 %v670, %v669
    %v685 = vpack.c.b16 %v672, %v671
    %v686 = vpack.c.b16 %v674, %v673
    %v687 = vpack.c.b16 %v676, %v675
    %v688 = vpack.c.b16 %v678, %v677
    %v689 = vpack.c.b16 %v680, %v679
    %v690 = vpack.c.b16 %v682, %v681
    %699 = vmatpush.bf16.msra.mxu0 %v690
    %700 = vmatpush.bf16.msra.mxu0 %v689
    %701 = vmatpush.bf16.msra.mxu0 %v688
    %702 = vmatpush.bf16.msra.mxu0 %v687
    %703 = vmatpush.bf16.msra.mxu0 %v686
    %704 = vmatpush.bf16.msra.mxu0 %v685
    %705 = vmatpush.bf16.msra.mxu0 %v684
    %706 = vmatpush.bf16.msra.mxu0 %v683
    %707 = vmatmul.bf16.gmra.mxu0 %v634
    %v708 = vpop.f32.mrf.mxu0
    %v709 = vadd.f32 0.0, %v708
    %v710 = vpop.f32.mrf.mxu0
    %v711 = vadd.f32 0.0, %v710
    %712 = vdwg.mxu0
    %v713 = vadd.f32 %v279, %v709
    %v714 = vadd.f32 %v281, %v711
    %v715 = vtanh.pop %v713
    %v716 = vtanh.pop %v714
    %v717 = vsub.f32 %v539, %v715
    %v718 = vsub.f32 %v540, %v716
    %v719 = vmul.f32 %v630, %v717
    %v720 = vmul.f32 %v631, %v718
    %v721 = vadd.f32 %v715, %v719
    %v722 = vadd.f32 %v716, %v720
    %723 = vst [vmem:[#allocation11 + $0x10] sm:$0xff] %v721
    %724 = vst [vmem:[#allocation11 + $0x18] sm:$0xff] %v722
    %v725 = vpack.c.bf16 %v722, %v721
    %v726 = vld [vmem:[#allocation10] sm:$0xf]
    %v727 = vld [vmem:[#allocation10 + $0x4] sm:$0xf]
    %v728 = vld [vmem:[#allocation10 + $0x8] sm:$0xf]
    %v729 = vld [vmem:[#allocation10 + $0xc] sm:$0xf]
    %v730 = vld [vmem:[#allocation10 + $0x10] sm:$0xf]
    %v731 = vld [vmem:[#allocation10 + $0x14] sm:$0xf]
    %v732 = vld [vmem:[#allocation10 + $0x18] sm:$0xf]
    %v733 = vld [vmem:[#allocation10 + $0x1c] sm:$0xf]
    %v734 = vld [vmem:[#allocation10 + $0x20] sm:$0xf]
    %v735 = vld [vmem:[#allocation10 + $0x24] sm:$0xf]
    %v736 = vld [vmem:[#allocation10 + $0x28] sm:$0xf]
    %v737 = vld [vmem:[#allocation10 + $0x2c] sm:$0xf]
    %v738 = vld [vmem:[#allocation10 + $0x30] sm:$0xf]
    %v739 = vld [vmem:[#allocation10 + $0x34] sm:$0xf]
    %v740 = vld [vmem:[#allocation10 + $0x38] sm:$0xf]
    %v741 = vld [vmem:[#allocation10 + $0x3c] sm:$0xf]
    %v758 = vunpack.c.l.b16 %v726
    %v759 = vunpack.c.l.b16 %v727
    %v760 = vunpack.c.l.b16 %v728
    %v761 = vunpack.c.l.b16 %v729
    %v762 = vunpack.c.l.b16 %v730
    %v763 = vunpack.c.l.b16 %v731
    %v764 = vunpack.c.l.b16 %v732
    %v765 = vunpack.c.l.b16 %v733
    %v766 = vunpack.c.l.b16 %v734
    %v767 = vunpack.c.l.b16 %v735
    %v768 = vunpack.c.l.b16 %v736
    %v769 = vunpack.c.l.b16 %v737
    %v770 = vunpack.c.l.b16 %v738
    %v771 = vunpack.c.l.b16 %v739
    %v772 = vunpack.c.l.b16 %v740
    %v773 = vunpack.c.l.b16 %v741
    %v774 = vpack.c.b16 %v759, %v758
    %v775 = vpack.c.b16 %v761, %v760
    %v776 = vpack.c.b16 %v763, %v762
    %v777 = vpack.c.b16 %v765, %v764
    %v778 = vpack.c.b16 %v767, %v766
    %v779 = vpack.c.b16 %v769, %v768
    %v780 = vpack.c.b16 %v771, %v770
    %v781 = vpack.c.b16 %v773, %v772
    %790 = vmatpush.bf16.msra.mxu0 %v781
    %791 = vmatpush.bf16.msra.mxu0 %v780
    %792 = vmatpush.bf16.msra.mxu0 %v779
    %793 = vmatpush.bf16.msra.mxu0 %v778
    %794 = vmatpush.bf16.msra.mxu0 %v777
    %795 = vmatpush.bf16.msra.mxu0 %v776
    %796 = vmatpush.bf16.msra.mxu0 %v775
    %797 = vmatpush.bf16.msra.mxu0 %v774
    %798 = vmatmul.bf16.gmra.mxu0 %v725
    %v799 = vpop.f32.mrf.mxu0
    %v800 = vadd.f32 0.0, %v799
    %v801 = vpop.f32.mrf.mxu0
    %v802 = vadd.f32 0.0, %v801
    %803 = vdwg.mxu0
    %v804 = vadd.f32 %v333, %v800
    %v805 = vadd.f32 %v335, %v802
    %v806 = vmul.f32 %v804, 0.5
    %v807 = vmul.f32 %v805, 0.5
    %v808 = vtanh.pop %v806
    %v809 = vtanh.pop %v807
    %v810 = vadd.f32 %v808, 1.0
    %v811 = vadd.f32 %v809, 1.0
    %v812 = vmul.f32 %v810, 0.5
    %v813 = vmul.f32 %v811, 0.5
    %v814 = vmul.f32 %v812, %v721
    %v815 = vmul.f32 %v813, %v722
    %v816 = vpack.c.bf16 %v815, %v814
    %v817 = vld [vmem:[#allocation8] sm:$0xf]
    %v818 = vld [vmem:[#allocation8 + $0x4] sm:$0xf]
    %v819 = vld [vmem:[#allocation8 + $0x8] sm:$0xf]
    %v820 = vld [vmem:[#allocation8 + $0xc] sm:$0xf]
    %v821 = vld [vmem:[#allocation8 + $0x10] sm:$0xf]
    %v822 = vld [vmem:[#allocation8 + $0x14] sm:$0xf]
    %v823 = vld [vmem:[#allocation8 + $0x18] sm:$0xf]
    %v824 = vld [vmem:[#allocation8 + $0x1c] sm:$0xf]
    %v825 = vld [vmem:[#allocation8 + $0x20] sm:$0xf]
    %v826 = vld [vmem:[#allocation8 + $0x24] sm:$0xf]
    %v827 = vld [vmem:[#allocation8 + $0x28] sm:$0xf]
    %v828 = vld [vmem:[#allocation8 + $0x2c] sm:$0xf]
    %v829 = vld [vmem:[#allocation8 + $0x30] sm:$0xf]
    %v830 = vld [vmem:[#allocation8 + $0x34] sm:$0xf]
    %v831 = vld [vmem:[#allocation8 + $0x38] sm:$0xf]
    %v832 = vld [vmem:[#allocation8 + $0x3c] sm:$0xf]
    %v849 = vunpack.c.l.b16 %v817
    %v850 = vunpack.c.l.b16 %v818
    %v851 = vunpack.c.l.b16 %v819
    %v852 = vunpack.c.l.b16 %v820
    %v853 = vunpack.c.l.b16 %v821
    %v854 = vunpack.c.l.b16 %v822
    %v855 = vunpack.c.l.b16 %v823
    %v856 = vunpack.c.l.b16 %v824
    %v857 = vunpack.c.l.b16 %v825
    %v858 = vunpack.c.l.b16 %v826
    %v859 = vunpack.c.l.b16 %v827
    %v860 = vunpack.c.l.b16 %v828
    %v861 = vunpack.c.l.b16 %v829
    %v862 = vunpack.c.l.b16 %v830
    %v863 = vunpack.c.l.b16 %v831
    %v864 = vunpack.c.l.b16 %v832
    %v865 = vpack.c.b16 %v850, %v849
    %v866 = vpack.c.b16 %v852, %v851
    %v867 = vpack.c.b16 %v854, %v853
    %v868 = vpack.c.b16 %v856, %v855
    %v869 = vpack.c.b16 %v858, %v857
    %v870 = vpack.c.b16 %v860, %v859
    %v871 = vpack.c.b16 %v862, %v861
    %v872 = vpack.c.b16 %v864, %v863
    %881 = vmatpush.bf16.msra.mxu0 %v872
    %882 = vmatpush.bf16.msra.mxu0 %v871
    %883 = vmatpush.bf16.msra.mxu0 %v870
    %884 = vmatpush.bf16.msra.mxu0 %v869
    %885 = vmatpush.bf16.msra.mxu0 %v868
    %886 = vmatpush.bf16.msra.mxu0 %v867
    %887 = vmatpush.bf16.msra.mxu0 %v866
    %888 = vmatpush.bf16.msra.mxu0 %v865
    %889 = vmatmul.bf16.gmra.mxu0 %v816
    %v890 = vpop.f32.mrf.mxu0
    %v891 = vadd.f32 0.0, %v890
    %v892 = vpop.f32.mrf.mxu0
    %v893 = vadd.f32 0.0, %v892
    %894 = vdwg.mxu0
    %v895 = vadd.f32 %v284, %v891
    %v896 = vadd.f32 %v286, %v893
    %v897 = vtanh.pop %v895
    %v898 = vtanh.pop %v896
    %v899 = vsub.f32 %v721, %v897
    %v900 = vsub.f32 %v722, %v898
    %v901 = vmul.f32 %v812, %v899
    %v902 = vmul.f32 %v813, %v900
    %v903 = vadd.f32 %v897, %v901
    %v904 = vadd.f32 %v898, %v902
    %905 = vst [vmem:[#allocation11 + $0x20] sm:$0xff] %v903
    %906 = vst [vmem:[#allocation11 + $0x28] sm:$0xff] %v904
    %v907 = vpack.c.bf16 %v904, %v903
    %v908 = vld [vmem:[#allocation10] sm:$0xf]
    %v909 = vld [vmem:[#allocation10 + $0x4] sm:$0xf]
    %v910 = vld [vmem:[#allocation10 + $0x8] sm:$0xf]
    %v911 = vld [vmem:[#allocation10 + $0xc] sm:$0xf]
    %v912 = vld [vmem:[#allocation10 + $0x10] sm:$0xf]
    %v913 = vld [vmem:[#allocation10 + $0x14] sm:$0xf]
    %v914 = vld [vmem:[#allocation10 + $0x18] sm:$0xf]
    %v915 = vld [vmem:[#allocation10 + $0x1c] sm:$0xf]
    %v916 = vld [vmem:[#allocation10 + $0x20] sm:$0xf]
    %v917 = vld [vmem:[#allocation10 + $0x24] sm:$0xf]
    %v918 = vld [vmem:[#allocation10 + $0x28] sm:$0xf]
    %v919 = vld [vmem:[#allocation10 + $0x2c] sm:$0xf]
    %v920 = vld [vmem:[#allocation10 + $0x30] sm:$0xf]
    %v921 = vld [vmem:[#allocation10 + $0x34] sm:$0xf]
    %v922 = vld [vmem:[#allocation10 + $0x38] sm:$0xf]
    %v923 = vld [vmem:[#allocation10 + $0x3c] sm:$0xf]
    %v940 = vunpack.c.l.b16 %v908
    %v941 = vunpack.c.l.b16 %v909
    %v942 = vunpack.c.l.b16 %v910
    %v943 = vunpack.c.l.b16 %v911
    %v944 = vunpack.c.l.b16 %v912
    %v945 = vunpack.c.l.b16 %v913
    %v946 = vunpack.c.l.b16 %v914
    %v947 = vunpack.c.l.b16 %v915
    %v948 = vunpack.c.l.b16 %v916
    %v949 = vunpack.c.l.b16 %v917
    %v950 = vunpack.c.l.b16 %v918
    %v951 = vunpack.c.l.b16 %v919
    %v952 = vunpack.c.l.b16 %v920
    %v953 = vunpack.c.l.b16 %v921
    %v954 = vunpack.c.l.b16 %v922
    %v955 = vunpack.c.l.b16 %v923
    %v956 = vpack.c.b16 %v941, %v940
    %v957 = vpack.c.b16 %v943, %v942
    %v958 = vpack.c.b16 %v945, %v944
    %v959 = vpack.c.b16 %v947, %v946
    %v960 = vpack.c.b16 %v949, %v948
    %v961 = vpack.c.b16 %v951, %v950
    %v962 = vpack.c.b16 %v953, %v952
    %v963 = vpack.c.b16 %v955, %v954
    %972 = vmatpush.bf16.msra.mxu0 %v963
    %973 = vmatpush.bf16.msra.mxu0 %v962
    %974 = vmatpush.bf16.msra.mxu0 %v961
    %975 = vmatpush.bf16.msra.mxu0 %v960
    %976 = vmatpush.bf16.msra.mxu0 %v959
    %977 = vmatpush.bf16.msra.mxu0 %v958
    %978 = vmatpush.bf16.msra.mxu0 %v957
    %979 = vmatpush.bf16.msra.mxu0 %v956
    %980 = vmatmul.bf16.gmra.mxu0 %v907
    %v981 = vpop.f32.mrf.mxu0
    %v982 = vadd.f32 0.0, %v981
    %v983 = vpop.f32.mrf.mxu0
    %v984 = vadd.f32 0.0, %v983
    %985 = vdwg.mxu0
    %v986 = vadd.f32 %v338, %v982
    %v987 = vadd.f32 %v340, %v984
    %v988 = vmul.f32 %v986, 0.5
    %v989 = vmul.f32 %v987, 0.5
    %v990 = vtanh.pop %v988
    %v991 = vtanh.pop %v989
    %v992 = vadd.f32 %v990, 1.0
    %v993 = vadd.f32 %v991, 1.0
    %v994 = vmul.f32 %v992, 0.5
    %v995 = vmul.f32 %v993, 0.5
    %v996 = vmul.f32 %v994, %v903
    %v997 = vmul.f32 %v995, %v904
    %v998 = vpack.c.bf16 %v997, %v996
    %v999 = vld [vmem:[#allocation8] sm:$0xf]
    %v1000 = vld [vmem:[#allocation8 + $0x4] sm:$0xf]
    %v1001 = vld [vmem:[#allocation8 + $0x8] sm:$0xf]
    %v1002 = vld [vmem:[#allocation8 + $0xc] sm:$0xf]
    %v1003 = vld [vmem:[#allocation8 + $0x10] sm:$0xf]
    %v1004 = vld [vmem:[#allocation8 + $0x14] sm:$0xf]
    %v1005 = vld [vmem:[#allocation8 + $0x18] sm:$0xf]
    %v1006 = vld [vmem:[#allocation8 + $0x1c] sm:$0xf]
    %v1007 = vld [vmem:[#allocation8 + $0x20] sm:$0xf]
    %v1008 = vld [vmem:[#allocation8 + $0x24] sm:$0xf]
    %v1009 = vld [vmem:[#allocation8 + $0x28] sm:$0xf]
    %v1010 = vld [vmem:[#allocation8 + $0x2c] sm:$0xf]
    %v1011 = vld [vmem:[#allocation8 + $0x30] sm:$0xf]
    %v1012 = vld [vmem:[#allocation8 + $0x34] sm:$0xf]
    %v1013 = vld [vmem:[#allocation8 + $0x38] sm:$0xf]
    %v1014 = vld [vmem:[#allocation8 + $0x3c] sm:$0xf]
    %v1031 = vunpack.c.l.b16 %v999
    %v1032 = vunpack.c.l.b16 %v1000
    %v1033 = vunpack.c.l.b16 %v1001
    %v1034 = vunpack.c.l.b16 %v1002
    %v1035 = vunpack.c.l.b16 %v1003
    %v1036 = vunpack.c.l.b16 %v1004
    %v1037 = vunpack.c.l.b16 %v1005
    %v1038 = vunpack.c.l.b16 %v1006
    %v1039 = vunpack.c.l.b16 %v1007
    %v1040 = vunpack.c.l.b16 %v1008
    %v1041 = vunpack.c.l.b16 %v1009
    %v1042 = vunpack.c.l.b16 %v1010
    %v1043 = vunpack.c.l.b16 %v1011
    %v1044 = vunpack.c.l.b16 %v1012
    %v1045 = vunpack.c.l.b16 %v1013
    %v1046 = vunpack.c.l.b16 %v1014
    %v1047 = vpack.c.b16 %v1032, %v1031
    %v1048 = vpack.c.b16 %v1034, %v1033
    %v1049 = vpack.c.b16 %v1036, %v1035
    %v1050 = vpack.c.b16 %v1038, %v1037
    %v1051 = vpack.c.b16 %v1040, %v1039
    %v1052 = vpack.c.b16 %v1042, %v1041
    %v1053 = vpack.c.b16 %v1044, %v1043
    %v1054 = vpack.c.b16 %v1046, %v1045
    %1063 = vmatpush.bf16.msra.mxu0 %v1054
    %1064 = vmatpush.bf16.msra.mxu0 %v1053
    %1065 = vmatpush.bf16.msra.mxu0 %v1052
    %1066 = vmatpush.bf16.msra.mxu0 %v1051
    %1067 = vmatpush.bf16.msra.mxu0 %v1050
    %1068 = vmatpush.bf16.msra.mxu0 %v1049
    %1069 = vmatpush.bf16.msra.mxu0 %v1048
    %1070 = vmatpush.bf16.msra.mxu0 %v1047
    %1071 = vmatmul.bf16.gmra.mxu0 %v998
    %v1072 = vpop.f32.mrf.mxu0
    %v1073 = vadd.f32 0.0, %v1072
    %v1074 = vpop.f32.mrf.mxu0
    %v1075 = vadd.f32 0.0, %v1074
    %1076 = vdwg.mxu0
    %v1077 = vadd.f32 %v289, %v1073
    %v1078 = vadd.f32 %v291, %v1075
    %v1079 = vtanh.pop %v1077
    %v1080 = vtanh.pop %v1078
    %v1081 = vsub.f32 %v903, %v1079
    %v1082 = vsub.f32 %v904, %v1080
    %v1083 = vmul.f32 %v994, %v1081
    %v1084 = vmul.f32 %v995, %v1082
    %v1085 = vadd.f32 %v1079, %v1083
    %v1086 = vadd.f32 %v1080, %v1084
    %1087 = vst [vmem:[#allocation11 + $0x30] sm:$0xff] %v1085
    %1088 = vst [vmem:[#allocation11 + $0x38] sm:$0xff] %v1086
    %v1089 = vpack.c.bf16 %v1086, %v1085
    %v1090 = vld [vmem:[#allocation10] sm:$0xf]
    %v1091 = vld [vmem:[#allocation10 + $0x4] sm:$0xf]
    %v1092 = vld [vmem:[#allocation10 + $0x8] sm:$0xf]
    %v1093 = vld [vmem:[#allocation10 + $0xc] sm:$0xf]
    %v1094 = vld [vmem:[#allocation10 + $0x10] sm:$0xf]
    %v1095 = vld [vmem:[#allocation10 + $0x14] sm:$0xf]
    %v1096 = vld [vmem:[#allocation10 + $0x18] sm:$0xf]
    %v1097 = vld [vmem:[#allocation10 + $0x1c] sm:$0xf]
    %v1098 = vld [vmem:[#allocation10 + $0x20] sm:$0xf]
    %v1099 = vld [vmem:[#allocation10 + $0x24] sm:$0xf]
    %v1100 = vld [vmem:[#allocation10 + $0x28] sm:$0xf]
    %v1101 = vld [vmem:[#allocation10 + $0x2c] sm:$0xf]
    %v1102 = vld [vmem:[#allocation10 + $0x30] sm:$0xf]
    %v1103 = vld [vmem:[#allocation10 + $0x34] sm:$0xf]
    %v1104 = vld [vmem:[#allocation10 + $0x38] sm:$0xf]
    %v1105 = vld [vmem:[#allocation10 + $0x3c] sm:$0xf]
    %v1122 = vunpack.c.l.b16 %v1090
    %v1123 = vunpack.c.l.b16 %v1091
    %v1124 = vunpack.c.l.b16 %v1092
    %v1125 = vunpack.c.l.b16 %v1093
    %v1126 = vunpack.c.l.b16 %v1094
    %v1127 = vunpack.c.l.b16 %v1095
    %v1128 = vunpack.c.l.b16 %v1096
    %v1129 = vunpack.c.l.b16 %v1097
    %v1130 = vunpack.c.l.b16 %v1098
    %v1131 = vunpack.c.l.b16 %v1099
    %v1132 = vunpack.c.l.b16 %v1100
    %v1133 = vunpack.c.l.b16 %v1101
    %v1134 = vunpack.c.l.b16 %v1102
    %v1135 = vunpack.c.l.b16 %v1103
    %v1136 = vunpack.c.l.b16 %v1104
    %v1137 = vunpack.c.l.b16 %v1105
    %v1138 = vpack.c.b16 %v1123, %v1122
    %v1139 = vpack.c.b16 %v1125, %v1124
    %v1140 = vpack.c.b16 %v1127, %v1126
    %v1141 = vpack.c.b16 %v1129, %v1128
    %v1142 = vpack.c.b16 %v1131, %v1130
    %v1143 = vpack.c.b16 %v1133, %v1132
    %v1144 = vpack.c.b16 %v1135, %v1134
    %v1145 = vpack.c.b16 %v1137, %v1136
    %1154 = vmatpush.bf16.msra.mxu0 %v1145
    %1155 = vmatpush.bf16.msra.mxu0 %v1144
    %1156 = vmatpush.bf16.msra.mxu0 %v1143
    %1157 = vmatpush.bf16.msra.mxu0 %v1142
    %1158 = vmatpush.bf16.msra.mxu0 %v1141
    %1159 = vmatpush.bf16.msra.mxu0 %v1140
    %1160 = vmatpush.bf16.msra.mxu0 %v1139
    %1161 = vmatpush.bf16.msra.mxu0 %v1138
    %1162 = vmatmul.bf16.gmra.mxu0 %v1089
    %v1163 = vpop.f32.mrf.mxu0
    %v1164 = vadd.f32 0.0, %v1163
    %v1165 = vpop.f32.mrf.mxu0
    %v1166 = vadd.f32 0.0, %v1165
    %1167 = vdwg.mxu0
    %v1168 = vadd.f32 %v343, %v1164
    %v1169 = vadd.f32 %v345, %v1166
    %v1170 = vmul.f32 %v1168, 0.5
    %v1171 = vmul.f32 %v1169, 0.5
    %v1172 = vtanh.pop %v1170
    %v1173 = vtanh.pop %v1171
    %v1174 = vadd.f32 %v1172, 1.0
    %v1175 = vadd.f32 %v1173, 1.0
    %v1176 = vmul.f32 %v1174, 0.5
    %v1177 = vmul.f32 %v1175, 0.5
    %v1178 = vmul.f32 %v1176, %v1085
    %v1179 = vmul.f32 %v1177, %v1086
    %v1180 = vpack.c.bf16 %v1179, %v1178
    %v1181 = vld [vmem:[#allocation8] sm:$0xf]
    %v1182 = vld [vmem:[#allocation8 + $0x4] sm:$0xf]
    %v1183 = vld [vmem:[#allocation8 + $0x8] sm:$0xf]
    %v1184 = vld [vmem:[#allocation8 + $0xc] sm:$0xf]
    %v1185 = vld [vmem:[#allocation8 + $0x10] sm:$0xf]
    %v1186 = vld [vmem:[#allocation8 + $0x14] sm:$0xf]
    %v1187 = vld [vmem:[#allocation8 + $0x18] sm:$0xf]
    %v1188 = vld [vmem:[#allocation8 + $0x1c] sm:$0xf]
    %v1189 = vld [vmem:[#allocation8 + $0x20] sm:$0xf]
    %v1190 = vld [vmem:[#allocation8 + $0x24] sm:$0xf]
    %v1191 = vld [vmem:[#allocation8 + $0x28] sm:$0xf]
    %v1192 = vld [vmem:[#allocation8 + $0x2c] sm:$0xf]
    %v1193 = vld [vmem:[#allocation8 + $0x30] sm:$0xf]
    %v1194 = vld [vmem:[#allocation8 + $0x34] sm:$0xf]
    %v1195 = vld [vmem:[#allocation8 + $0x38] sm:$0xf]
    %v1196 = vld [vmem:[#allocation8 + $0x3c] sm:$0xf]
    %v1213 = vunpack.c.l.b16 %v1181
    %v1214 = vunpack.c.l.b16 %v1182
    %v1215 = vunpack.c.l.b16 %v1183
    %v1216 = vunpack.c.l.b16 %v1184
    %v1217 = vunpack.c.l.b16 %v1185
    %v1218 = vunpack.c.l.b16 %v1186
    %v1219 = vunpack.c.l.b16 %v1187
    %v1220 = vunpack.c.l.b16 %v1188
    %v1221 = vunpack.c.l.b16 %v1189
    %v1222 = vunpack.c.l.b16 %v1190
    %v1223 = vunpack.c.l.b16 %v1191
    %v1224 = vunpack.c.l.b16 %v1192
    %v1225 = vunpack.c.l.b16 %v1193
    %v1226 = vunpack.c.l.b16 %v1194
    %v1227 = vunpack.c.l.b16 %v1195
    %v1228 = vunpack.c.l.b16 %v1196
    %v1229 = vpack.c.b16 %v1214, %v1213
    %v1230 = vpack.c.b16 %v1216, %v1215
    %v1231 = vpack.c.b16 %v1218, %v1217
    %v1232 = vpack.c.b16 %v1220, %v1219
    %v1233 = vpack.c.b16 %v1222, %v1221
    %v1234 = vpack.c.b16 %v1224, %v1223
    %v1235 = vpack.c.b16 %v1226, %v1225
    %v1236 = vpack.c.b16 %v1228, %v1227
    %1245 = vmatpush.bf16.msra.mxu0 %v1236
    %1246 = vmatpush.bf16.msra.mxu0 %v1235
    %1247 = vmatpush.bf16.msra.mxu0 %v1234
    %1248 = vmatpush.bf16.msra.mxu0 %v1233
    %1249 = vmatpush.bf16.msra.mxu0 %v1232
    %1250 = vmatpush.bf16.msra.mxu0 %v1231
    %1251 = vmatpush.bf16.msra.mxu0 %v1230
    %1252 = vmatpush.bf16.msra.mxu0 %v1229
    %1253 = vmatmul.bf16.gmra.mxu0 %v1180
    %v1254 = vpop.f32.mrf.mxu0
    %v1255 = vadd.f32 0.0, %v1254
    %v1256 = vpop.f32.mrf.mxu0
    %v1257 = vadd.f32 0.0, %v1256
    %1258 = vdwg.mxu0
    %v1259 = vadd.f32 %v294, %v1255
    %v1260 = vadd.f32 %v296, %v1257
    %v1261 = vtanh.pop %v1259
    %v1262 = vtanh.pop %v1260
    %v1263 = vsub.f32 %v1085, %v1261
    %v1264 = vsub.f32 %v1086, %v1262
    %v1265 = vmul.f32 %v1176, %v1263
    %v1266 = vmul.f32 %v1177, %v1264
    %v1267 = vadd.f32 %v1261, %v1265
    %v1268 = vadd.f32 %v1262, %v1266
    %1269 = vst [vmem:[#allocation11 + $0x40] sm:$0xff] %v1267
    %1270 = vst [vmem:[#allocation11 + $0x48] sm:$0xff] %v1268
    %v1271 = vpack.c.bf16 %v1268, %v1267
    %v1272 = vld [vmem:[#allocation10] sm:$0xf]
    %v1273 = vld [vmem:[#allocation10 + $0x4] sm:$0xf]
    %v1274 = vld [vmem:[#allocation10 + $0x8] sm:$0xf]
    %v1275 = vld [vmem:[#allocation10 + $0xc] sm:$0xf]
    %v1276 = vld [vmem:[#allocation10 + $0x10] sm:$0xf]
    %v1277 = vld [vmem:[#allocation10 + $0x14] sm:$0xf]
    %v1278 = vld [vmem:[#allocation10 + $0x18] sm:$0xf]
    %v1279 = vld [vmem:[#allocation10 + $0x1c] sm:$0xf]
    %v1280 = vld [vmem:[#allocation10 + $0x20] sm:$0xf]
    %v1281 = vld [vmem:[#allocation10 + $0x24] sm:$0xf]
    %v1282 = vld [vmem:[#allocation10 + $0x28] sm:$0xf]
    %v1283 = vld [vmem:[#allocation10 + $0x2c] sm:$0xf]
    %v1284 = vld [vmem:[#allocation10 + $0x30] sm:$0xf]
    %v1285 = vld [vmem:[#allocation10 + $0x34] sm:$0xf]
    %v1286 = vld [vmem:[#allocation10 + $0x38] sm:$0xf]
    %v1287 = vld [vmem:[#allocation10 + $0x3c] sm:$0xf]
    %v1304 = vunpack.c.l.b16 %v1272
    %v1305 = vunpack.c.l.b16 %v1273
    %v1306 = vunpack.c.l.b16 %v1274
    %v1307 = vunpack.c.l.b16 %v1275
    %v1308 = vunpack.c.l.b16 %v1276
    %v1309 = vunpack.c.l.b16 %v1277
    %v1310 = vunpack.c.l.b16 %v1278
    %v1311 = vunpack.c.l.b16 %v1279
    %v1312 = vunpack.c.l.b16 %v1280
    %v1313 = vunpack.c.l.b16 %v1281
    %v1314 = vunpack.c.l.b16 %v1282
    %v1315 = vunpack.c.l.b16 %v1283
    %v1316 = vunpack.c.l.b16 %v1284
    %v1317 = vunpack.c.l.b16 %v1285
    %v1318 = vunpack.c.l.b16 %v1286
    %v1319 = vunpack.c.l.b16 %v1287
    %v1320 = vpack.c.b16 %v1305, %v1304
    %v1321 = vpack.c.b16 %v1307, %v1306
    %v1322 = vpack.c.b16 %v1309, %v1308
    %v1323 = vpack.c.b16 %v1311, %v1310
    %v1324 = vpack.c.b16 %v1313, %v1312
    %v1325 = vpack.c.b16 %v1315, %v1314
    %v1326 = vpack.c.b16 %v1317, %v1316
    %v1327 = vpack.c.b16 %v1319, %v1318
    %1336 = vmatpush.bf16.msra.mxu0 %v1327
    %1337 = vmatpush.bf16.msra.mxu0 %v1326
    %1338 = vmatpush.bf16.msra.mxu0 %v1325
    %1339 = vmatpush.bf16.msra.mxu0 %v1324
    %1340 = vmatpush.bf16.msra.mxu0 %v1323
    %1341 = vmatpush.bf16.msra.mxu0 %v1322
    %1342 = vmatpush.bf16.msra.mxu0 %v1321
    %1343 = vmatpush.bf16.msra.mxu0 %v1320
    %1344 = vmatmul.bf16.gmra.mxu0 %v1271
    %v1345 = vpop.f32.mrf.mxu0
    %v1346 = vadd.f32 0.0, %v1345
    %v1347 = vpop.f32.mrf.mxu0
    %v1348 = vadd.f32 0.0, %v1347
    %1349 = vdwg.mxu0
    %v1350 = vadd.f32 %v348, %v1346
    %v1351 = vadd.f32 %v350, %v1348
    %v1352 = vmul.f32 %v1350, 0.5
    %v1353 = vmul.f32 %v1351, 0.5
    %v1354 = vtanh.pop %v1352
    %v1355 = vtanh.pop %v1353
    %v1356 = vadd.f32 %v1354, 1.0
    %v1357 = vadd.f32 %v1355, 1.0
    %v1358 = vmul.f32 %v1356, 0.5
    %v1359 = vmul.f32 %v1357, 0.5
    %v1360 = vmul.f32 %v1358, %v1267
    %v1361 = vmul.f32 %v1359, %v1268
    %v1362 = vpack.c.bf16 %v1361, %v1360
    %v1363 = vld [vmem:[#allocation8] sm:$0xf]
    %v1364 = vld [vmem:[#allocation8 + $0x4] sm:$0xf]
    %v1365 = vld [vmem:[#allocation8 + $0x8] sm:$0xf]
    %v1366 = vld [vmem:[#allocation8 + $0xc] sm:$0xf]
    %v1367 = vld [vmem:[#allocation8 + $0x10] sm:$0xf]
    %v1368 = vld [vmem:[#allocation8 + $0x14] sm:$0xf]
    %v1369 = vld [vmem:[#allocation8 + $0x18] sm:$0xf]
    %v1370 = vld [vmem:[#allocation8 + $0x1c] sm:$0xf]
    %v1371 = vld [vmem:[#allocation8 + $0x20] sm:$0xf]
    %v1372 = vld [vmem:[#allocation8 + $0x24] sm:$0xf]
    %v1373 = vld [vmem:[#allocation8 + $0x28] sm:$0xf]
    %v1374 = vld [vmem:[#allocation8 + $0x2c] sm:$0xf]
    %v1375 = vld [vmem:[#allocation8 + $0x30] sm:$0xf]
    %v1376 = vld [vmem:[#allocation8 + $0x34] sm:$0xf]
    %v1377 = vld [vmem:[#allocation8 + $0x38] sm:$0xf]
    %v1378 = vld [vmem:[#allocation8 + $0x3c] sm:$0xf]
    %v1395 = vunpack.c.l.b16 %v1363
    %v1396 = vunpack.c.l.b16 %v1364
    %v1397 = vunpack.c.l.b16 %v1365
    %v1398 = vunpack.c.l.b16 %v1366
    %v1399 = vunpack.c.l.b16 %v1367
    %v1400 = vunpack.c.l.b16 %v1368
    %v1401 = vunpack.c.l.b16 %v1369
    %v1402 = vunpack.c.l.b16 %v1370
    %v1403 = vunpack.c.l.b16 %v1371
    %v1404 = vunpack.c.l.b16 %v1372
    %v1405 = vunpack.c.l.b16 %v1373
    %v1406 = vunpack.c.l.b16 %v1374
    %v1407 = vunpack.c.l.b16 %v1375
    %v1408 = vunpack.c.l.b16 %v1376
    %v1409 = vunpack.c.l.b16 %v1377
    %v1410 = vunpack.c.l.b16 %v1378
    %v1411 = vpack.c.b16 %v1396, %v1395
    %v1412 = vpack.c.b16 %v1398, %v1397
    %v1413 = vpack.c.b16 %v1400, %v1399
    %v1414 = vpack.c.b16 %v1402, %v1401
    %v1415 = vpack.c.b16 %v1404, %v1403
    %v1416 = vpack.c.b16 %v1406, %v1405
    %v1417 = vpack.c.b16 %v1408, %v1407
    %v1418 = vpack.c.b16 %v1410, %v1409
    %1427 = vmatpush.bf16.msra.mxu0 %v1418
    %1428 = vmatpush.bf16.msra.mxu0 %v1417
    %1429 = vmatpush.bf16.msra.mxu0 %v1416
    %1430 = vmatpush.bf16.msra.mxu0 %v1415
    %1431 = vmatpush.bf16.msra.mxu0 %v1414
    %1432 = vmatpush.bf16.msra.mxu0 %v1413
    %1433 = vmatpush.bf16.msra.mxu0 %v1412
    %1434 = vmatpush.bf16.msra.mxu0 %v1411
    %1435 = vmatmul.bf16.gmra.mxu0 %v1362
    %v1436 = vpop.f32.mrf.mxu0
    %v1437 = vadd.f32 0.0, %v1436
    %v1438 = vpop.f32.mrf.mxu0
    %v1439 = vadd.f32 0.0, %v1438
    %1440 = vdwg.mxu0
    %v1441 = vadd.f32 %v299, %v1437
    %v1442 = vadd.f32 %v301, %v1439
    %v1443 = vtanh.pop %v1441
    %v1444 = vtanh.pop %v1442
    %v1445 = vsub.f32 %v1267, %v1443
    %v1446 = vsub.f32 %v1268, %v1444
    %v1447 = vmul.f32 %v1358, %v1445
    %v1448 = vmul.f32 %v1359, %v1446
    %v1449 = vadd.f32 %v1443, %v1447
    %v1450 = vadd.f32 %v1444, %v1448
    %1451 = vst [vmem:[#allocation11 + $0x50] sm:$0xff] %v1449
    %1452 = vst [vmem:[#allocation11 + $0x58] sm:$0xff] %v1450
    %v1453 = vpack.c.bf16 %v1450, %v1449
    %v1454 = vld [vmem:[#allocation10] sm:$0xf]
    %v1455 = vld [vmem:[#allocation10 + $0x4] sm:$0xf]
    %v1456 = vld [vmem:[#allocation10 + $0x8] sm:$0xf]
    %v1457 = vld [vmem:[#allocation10 + $0xc] sm:$0xf]
    %v1458 = vld [vmem:[#allocation10 + $0x10] sm:$0xf]
    %v1459 = vld [vmem:[#allocation10 + $0x14] sm:$0xf]
    %v1460 = vld [vmem:[#allocation10 + $0x18] sm:$0xf]
    %v1461 = vld [vmem:[#allocation10 + $0x1c] sm:$0xf]
    %v1462 = vld [vmem:[#allocation10 + $0x20] sm:$0xf]
    %v1463 = vld [vmem:[#allocation10 + $0x24] sm:$0xf]
    %v1464 = vld [vmem:[#allocation10 + $0x28] sm:$0xf]
    %v1465 = vld [vmem:[#allocation10 + $0x2c] sm:$0xf]
    %v1466 = vld [vmem:[#allocation10 + $0x30] sm:$0xf]
    %v1467 = vld [vmem:[#allocation10 + $0x34] sm:$0xf]
    %v1468 = vld [vmem:[#allocation10 + $0x38] sm:$0xf]
    %v1469 = vld [vmem:[#allocation10 + $0x3c] sm:$0xf]
    %v1486 = vunpack.c.l.b16 %v1454
    %v1487 = vunpack.c.l.b16 %v1455
    %v1488 = vunpack.c.l.b16 %v1456
    %v1489 = vunpack.c.l.b16 %v1457
    %v1490 = vunpack.c.l.b16 %v1458
    %v1491 = vunpack.c.l.b16 %v1459
    %v1492 = vunpack.c.l.b16 %v1460
    %v1493 = vunpack.c.l.b16 %v1461
    %v1494 = vunpack.c.l.b16 %v1462
    %v1495 = vunpack.c.l.b16 %v1463
    %v1496 = vunpack.c.l.b16 %v1464
    %v1497 = vunpack.c.l.b16 %v1465
    %v1498 = vunpack.c.l.b16 %v1466
    %v1499 = vunpack.c.l.b16 %v1467
    %v1500 = vunpack.c.l.b16 %v1468
    %v1501 = vunpack.c.l.b16 %v1469
    %v1502 = vpack.c.b16 %v1487, %v1486
    %v1503 = vpack.c.b16 %v1489, %v1488
    %v1504 = vpack.c.b16 %v1491, %v1490
    %v1505 = vpack.c.b16 %v1493, %v1492
    %v1506 = vpack.c.b16 %v1495, %v1494
    %v1507 = vpack.c.b16 %v1497, %v1496
    %v1508 = vpack.c.b16 %v1499, %v1498
    %v1509 = vpack.c.b16 %v1501, %v1500
    %1518 = vmatpush.bf16.msra.mxu0 %v1509
    %1519 = vmatpush.bf16.msra.mxu0 %v1508
    %1520 = vmatpush.bf16.msra.mxu0 %v1507
    %1521 = vmatpush.bf16.msra.mxu0 %v1506
    %1522 = vmatpush.bf16.msra.mxu0 %v1505
    %1523 = vmatpush.bf16.msra.mxu0 %v1504
    %1524 = vmatpush.bf16.msra.mxu0 %v1503
    %1525 = vmatpush.bf16.msra.mxu0 %v1502
    %1526 = vmatmul.bf16.gmra.mxu0 %v1453
    %v1527 = vpop.f32.mrf.mxu0
    %v1528 = vadd.f32 0.0, %v1527
    %v1529 = vpop.f32.mrf.mxu0
    %v1530 = vadd.f32 0.0, %v1529
    %1531 = vdwg.mxu0
    %v1532 = vadd.f32 %v353, %v1528
    %v1533 = vadd.f32 %v355, %v1530
    %v1534 = vmul.f32 %v1532, 0.5
    %v1535 = vmul.f32 %v1533, 0.5
    %v1536 = vtanh.pop %v1534
    %v1537 = vtanh.pop %v1535
    %v1538 = vadd.f32 %v1536, 1.0
    %v1539 = vadd.f32 %v1537, 1.0
    %v1540 = vmul.f32 %v1538, 0.5
    %v1541 = vmul.f32 %v1539, 0.5
    %v1542 = vmul.f32 %v1540, %v1449
    %v1543 = vmul.f32 %v1541, %v1450
    %v1544 = vpack.c.bf16 %v1543, %v1542
    %v1545 = vld [vmem:[#allocation8] sm:$0xf]
    %v1546 = vld [vmem:[#allocation8 + $0x4] sm:$0xf]
    %v1547 = vld [vmem:[#allocation8 + $0x8] sm:$0xf]
    %v1548 = vld [vmem:[#allocation8 + $0xc] sm:$0xf]
    %v1549 = vld [vmem:[#allocation8 + $0x10] sm:$0xf]
    %v1550 = vld [vmem:[#allocation8 + $0x14] sm:$0xf]
    %v1551 = vld [vmem:[#allocation8 + $0x18] sm:$0xf]
    %v1552 = vld [vmem:[#allocation8 + $0x1c] sm:$0xf]
    %v1553 = vld [vmem:[#allocation8 + $0x20] sm:$0xf]
    %v1554 = vld [vmem:[#allocation8 + $0x24] sm:$0xf]
    %v1555 = vld [vmem:[#allocation8 + $0x28] sm:$0xf]
    %v1556 = vld [vmem:[#allocation8 + $0x2c] sm:$0xf]
    %v1557 = vld [vmem:[#allocation8 + $0x30] sm:$0xf]
    %v1558 = vld [vmem:[#allocation8 + $0x34] sm:$0xf]
    %v1559 = vld [vmem:[#allocation8 + $0x38] sm:$0xf]
    %v1560 = vld [vmem:[#allocation8 + $0x3c] sm:$0xf]
    %v1577 = vunpack.c.l.b16 %v1545
    %v1578 = vunpack.c.l.b16 %v1546
    %v1579 = vunpack.c.l.b16 %v1547
    %v1580 = vunpack.c.l.b16 %v1548
    %v1581 = vunpack.c.l.b16 %v1549
    %v1582 = vunpack.c.l.b16 %v1550
    %v1583 = vunpack.c.l.b16 %v1551
    %v1584 = vunpack.c.l.b16 %v1552
    %v1585 = vunpack.c.l.b16 %v1553
    %v1586 = vunpack.c.l.b16 %v1554
    %v1587 = vunpack.c.l.b16 %v1555
    %v1588 = vunpack.c.l.b16 %v1556
    %v1589 = vunpack.c.l.b16 %v1557
    %v1590 = vunpack.c.l.b16 %v1558
    %v1591 = vunpack.c.l.b16 %v1559
    %v1592 = vunpack.c.l.b16 %v1560
    %v1593 = vpack.c.b16 %v1578, %v1577
    %v1594 = vpack.c.b16 %v1580, %v1579
    %v1595 = vpack.c.b16 %v1582, %v1581
    %v1596 = vpack.c.b16 %v1584, %v1583
    %v1597 = vpack.c.b16 %v1586, %v1585
    %v1598 = vpack.c.b16 %v1588, %v1587
    %v1599 = vpack.c.b16 %v1590, %v1589
    %v1600 = vpack.c.b16 %v1592, %v1591
    %1609 = vmatpush.bf16.msra.mxu0 %v1600
    %1610 = vmatpush.bf16.msra.mxu0 %v1599
    %1611 = vmatpush.bf16.msra.mxu0 %v1598
    %1612 = vmatpush.bf16.msra.mxu0 %v1597
    %1613 = vmatpush.bf16.msra.mxu0 %v1596
    %1614 = vmatpush.bf16.msra.mxu0 %v1595
    %1615 = vmatpush.bf16.msra.mxu0 %v1594
    %1616 = vmatpush.bf16.msra.mxu0 %v1593
    %1617 = vmatmul.bf16.gmra.mxu0 %v1544
    %v1618 = vpop.f32.mrf.mxu0
    %v1619 = vadd.f32 0.0, %v1618
    %v1620 = vpop.f32.mrf.mxu0
    %v1621 = vadd.f32 0.0, %v1620
    %1622 = vdwg.mxu0
    %v1623 = vadd.f32 %v304, %v1619
    %v1624 = vadd.f32 %v306, %v1621
    %v1625 = vtanh.pop %v1623
    %v1626 = vtanh.pop %v1624
    %v1627 = vsub.f32 %v1449, %v1625
    %v1628 = vsub.f32 %v1450, %v1626
    %v1629 = vmul.f32 %v1540, %v1627
    %v1630 = vmul.f32 %v1541, %v1628
    %v1631 = vadd.f32 %v1625, %v1629
    %v1632 = vadd.f32 %v1626, %v1630
    %1633 = vst [vmem:[#allocation11 + $0x60] sm:$0xff] %v1631
    %1634 = vst [vmem:[#allocation11 + $0x68] sm:$0xff] %v1632
    %v1635 = vpack.c.bf16 %v1632, %v1631
    %v1636 = vld [vmem:[#allocation10] sm:$0xf]
    %v1637 = vld [vmem:[#allocation10 + $0x4] sm:$0xf]
    %v1638 = vld [vmem:[#allocation10 + $0x8] sm:$0xf]
    %v1639 = vld [vmem:[#allocation10 + $0xc] sm:$0xf]
    %v1640 = vld [vmem:[#allocation10 + $0x10] sm:$0xf]
    %v1641 = vld [vmem:[#allocation10 + $0x14] sm:$0xf]
    %v1642 = vld [vmem:[#allocation10 + $0x18] sm:$0xf]
    %v1643 = vld [vmem:[#allocation10 + $0x1c] sm:$0xf]
    %v1644 = vld [vmem:[#allocation10 + $0x20] sm:$0xf]
    %v1645 = vld [vmem:[#allocation10 + $0x24] sm:$0xf]
    %v1646 = vld [vmem:[#allocation10 + $0x28] sm:$0xf]
    %v1647 = vld [vmem:[#allocation10 + $0x2c] sm:$0xf]
    %v1648 = vld [vmem:[#allocation10 + $0x30] sm:$0xf]
    %v1649 = vld [vmem:[#allocation10 + $0x34] sm:$0xf]
    %v1650 = vld [vmem:[#allocation10 + $0x38] sm:$0xf]
    %v1651 = vld [vmem:[#allocation10 + $0x3c] sm:$0xf]
    %v1668 = vunpack.c.l.b16 %v1636
    %v1669 = vunpack.c.l.b16 %v1637
    %v1670 = vunpack.c.l.b16 %v1638
    %v1671 = vunpack.c.l.b16 %v1639
    %v1672 = vunpack.c.l.b16 %v1640
    %v1673 = vunpack.c.l.b16 %v1641
    %v1674 = vunpack.c.l.b16 %v1642
    %v1675 = vunpack.c.l.b16 %v1643
    %v1676 = vunpack.c.l.b16 %v1644
    %v1677 = vunpack.c.l.b16 %v1645
    %v1678 = vunpack.c.l.b16 %v1646
    %v1679 = vunpack.c.l.b16 %v1647
    %v1680 = vunpack.c.l.b16 %v1648
    %v1681 = vunpack.c.l.b16 %v1649
    %v1682 = vunpack.c.l.b16 %v1650
    %v1683 = vunpack.c.l.b16 %v1651
    %v1684 = vpack.c.b16 %v1669, %v1668
    %v1685 = vpack.c.b16 %v1671, %v1670
    %v1686 = vpack.c.b16 %v1673, %v1672
    %v1687 = vpack.c.b16 %v1675, %v1674
    %v1688 = vpack.c.b16 %v1677, %v1676
    %v1689 = vpack.c.b16 %v1679, %v1678
    %v1690 = vpack.c.b16 %v1681, %v1680
    %v1691 = vpack.c.b16 %v1683, %v1682
    %1700 = vmatpush.bf16.msra.mxu0 %v1691
    %1701 = vmatpush.bf16.msra.mxu0 %v1690
    %1702 = vmatpush.bf16.msra.mxu0 %v1689
    %1703 = vmatpush.bf16.msra.mxu0 %v1688
    %1704 = vmatpush.bf16.msra.mxu0 %v1687
    %1705 = vmatpush.bf16.msra.mxu0 %v1686
    %1706 = vmatpush.bf16.msra.mxu0 %v1685
    %1707 = vmatpush.bf16.msra.mxu0 %v1684
    %1708 = vmatmul.bf16.gmra.mxu0 %v1635
    %v1709 = vpop.f32.mrf.mxu0
    %v1710 = vadd.f32 0.0, %v1709
    %v1711 = vpop.f32.mrf.mxu0
    %v1712 = vadd.f32 0.0, %v1711
    %1713 = vdwg.mxu0
    %v1714 = vadd.f32 %v358, %v1710
    %v1715 = vadd.f32 %v360, %v1712
    %v1716 = vmul.f32 %v1714, 0.5
    %v1717 = vmul.f32 %v1715, 0.5
    %v1718 = vtanh.pop %v1716
    %v1719 = vtanh.pop %v1717
    %v1720 = vadd.f32 %v1718, 1.0
    %v1721 = vadd.f32 %v1719, 1.0
    %v1722 = vmul.f32 %v1720, 0.5
    %v1723 = vmul.f32 %v1721, 0.5
    %v1724 = vmul.f32 %v1722, %v1631
    %v1725 = vmul.f32 %v1723, %v1632
    %v1726 = vpack.c.bf16 %v1725, %v1724
    %v1727 = vld [vmem:[#allocation8] sm:$0xf]
    %v1728 = vld [vmem:[#allocation8 + $0x4] sm:$0xf]
    %v1729 = vld [vmem:[#allocation8 + $0x8] sm:$0xf]
    %v1730 = vld [vmem:[#allocation8 + $0xc] sm:$0xf]
    %v1731 = vld [vmem:[#allocation8 + $0x10] sm:$0xf]
    %v1732 = vld [vmem:[#allocation8 + $0x14] sm:$0xf]
    %v1733 = vld [vmem:[#allocation8 + $0x18] sm:$0xf]
    %v1734 = vld [vmem:[#allocation8 + $0x1c] sm:$0xf]
    %v1735 = vld [vmem:[#allocation8 + $0x20] sm:$0xf]
    %v1736 = vld [vmem:[#allocation8 + $0x24] sm:$0xf]
    %v1737 = vld [vmem:[#allocation8 + $0x28] sm:$0xf]
    %v1738 = vld [vmem:[#allocation8 + $0x2c] sm:$0xf]
    %v1739 = vld [vmem:[#allocation8 + $0x30] sm:$0xf]
    %v1740 = vld [vmem:[#allocation8 + $0x34] sm:$0xf]
    %v1741 = vld [vmem:[#allocation8 + $0x38] sm:$0xf]
    %v1742 = vld [vmem:[#allocation8 + $0x3c] sm:$0xf]
    %v1759 = vunpack.c.l.b16 %v1727
    %v1760 = vunpack.c.l.b16 %v1728
    %v1761 = vunpack.c.l.b16 %v1729
    %v1762 = vunpack.c.l.b16 %v1730
    %v1763 = vunpack.c.l.b16 %v1731
    %v1764 = vunpack.c.l.b16 %v1732
    %v1765 = vunpack.c.l.b16 %v1733
    %v1766 = vunpack.c.l.b16 %v1734
    %v1767 = vunpack.c.l.b16 %v1735
    %v1768 = vunpack.c.l.b16 %v1736
    %v1769 = vunpack.c.l.b16 %v1737
    %v1770 = vunpack.c.l.b16 %v1738
    %v1771 = vunpack.c.l.b16 %v1739
    %v1772 = vunpack.c.l.b16 %v1740
    %v1773 = vunpack.c.l.b16 %v1741
    %v1774 = vunpack.c.l.b16 %v1742
    %v1775 = vpack.c.b16 %v1760, %v1759
    %v1776 = vpack.c.b16 %v1762, %v1761
    %v1777 = vpack.c.b16 %v1764, %v1763
    %v1778 = vpack.c.b16 %v1766, %v1765
    %v1779 = vpack.c.b16 %v1768, %v1767
    %v1780 = vpack.c.b16 %v1770, %v1769
    %v1781 = vpack.c.b16 %v1772, %v1771
    %v1782 = vpack.c.b16 %v1774, %v1773
    %1791 = vmatpush.bf16.msra.mxu0 %v1782
    %1792 = vmatpush.bf16.msra.mxu0 %v1781
    %1793 = vmatpush.bf16.msra.mxu0 %v1780
    %1794 = vmatpush.bf16.msra.mxu0 %v1779
    %1795 = vmatpush.bf16.msra.mxu0 %v1778
    %1796 = vmatpush.bf16.msra.mxu0 %v1777
    %1797 = vmatpush.bf16.msra.mxu0 %v1776
    %1798 = vmatpush.bf16.msra.mxu0 %v1775
    %1799 = vmatmul.bf16.gmra.mxu0 %v1726
    %v1800 = vpop.f32.mrf.mxu0
    %v1801 = vadd.f32 0.0, %v1800
    %v1802 = vpop.f32.mrf.mxu0
    %v1803 = vadd.f32 0.0, %v1802
    %1804 = vdwg.mxu0
    %v1805 = vadd.f32 %v309, %v1801
    %v1806 = vadd.f32 %v311, %v1803
    %v1807 = vtanh.pop %v1805
    %v1808 = vtanh.pop %v1806
    %v1809 = vsub.f32 %v1631, %v1807
    %v1810 = vsub.f32 %v1632, %v1808
    %v1811 = vmul.f32 %v1722, %v1809
    %v1812 = vmul.f32 %v1723, %v1810
    %v1813 = vadd.f32 %v1807, %v1811
    %v1814 = vadd.f32 %v1808, %v1812
    %1815 = vst [vmem:[#allocation11 + $0x70] sm:$0xff] %v1813
    %1816 = vst [vmem:[#allocation11 + $0x78] sm:$0xff] %v1814
    // Predicated region
    $region42: #{tpu_custom_call.1} parent=1 // pred_check
      _
    $region43: #{tpu_custom_call.1} parent=1 // pred_check_branch
      %1818 = sbr.rel (0) target = $region45
    $region44: #{tpu_custom_call.1} parent=1 // pred_region
      %1820 = vsyncadd [#allocation4], 0
      %s1821 = sshll.u32 [#allocation11], 4
      %s1822 = int_to_ptr.vmem [resolvable:$true] %s1821
      %s1823 = sshll.u32 %s5, 4
      %s1824 = int_to_ptr.hbm [resolvable:$true] %s1823
      %1829 = dma.vmem_to_hbm [thread:$0]  %s1822, 2048, %s1824, [#allocation4], 128, 128, 8
    $region45: #{tpu_custom_call.1} parent=1 // pred_fallthru
      _
    // Predicated region
    $region46: #{tpu_custom_call.1} parent=1 // pred_check
      _
    $region47: #{tpu_custom_call.1} parent=1 // pred_check_branch
      %1831 = sbr.rel (0) target = $region49
    $region48: #{tpu_custom_call.1} parent=1 // pred_region
      %1833 = dma.done [#allocation4], 2048
    $region49: #{tpu_custom_call.1} parent=1 // pred_fallthru
      _
    %1834 = vsyncpa [#allocation3], 1
    %1835 = vsyncpa [#allocation6], 1
    %1836 = vsyncpa [#allocation9], 1
    %1837 = vsyncpa [#allocation4], 1

</llo_original>
